<compile_context>
chip_gen: v7x
topology: tpu7x:2x2x1
jax: 0.10.0
libtpu: 0.0.40
codegen_flags: <defaults>
</compile_context>

<pallas_src>
import math

import jax
import jax.numpy as jnp
import numpy as np
from jax.experimental import pallas as pl
from jax.experimental.pallas import tpu as pltpu


# -----------------------------------------------------------------------------
# Pallas kernel
# -----------------------------------------------------------------------------
def gru_fc_kernel(
    x_ref,        # (T, Bt, D)      time-major input tile
    wih_f_ref,    # (D, 3H)         forward  W_ih^T  (gate order r, z, n)
    bih_f_ref,    # (1, 3H)
    wih_b_ref,    # (D, 3H)         backward W_ih^T
    bih_b_ref,    # (1, 3H)
    whh_ref,      # (2H, 6H)        block-diag [W_hh_f^T ; W_hh_b^T]
    bhh_ref,      # (1, 6H)         [b_hh_f | b_hh_b]
    wfc_ref,      # (2H, Cp)        fc weight^T, output channels padded to Cp
    bfc_ref,      # (1, Cp)
    out_ref,      # (T, Bt, Cp)
    gif_ref,      # scratch (T, Bt, 3H)  hoisted forward  input projections
    gib_ref,      # scratch (T, Bt, 3H)  hoisted backward input projections
    hidf_ref,     # scratch (T, Bt, H)   forward hidden states
    hidb_ref,     # scratch (T, Bt, H)   backward hidden states
):
    T, B, D = x_ref.shape
    H = whh_ref.shape[0] // 2
    Cp = out_ref.shape[-1]
    f32 = jnp.float32

    # -------- phase 1: hoisted input projections (no recurrence dependency) ----
    x_flat = x_ref[...].reshape(T * B, D)
    gif_ref[...] = (
        jnp.dot(x_flat, wih_f_ref[...], preferred_element_type=f32) + bih_f_ref[...]
    ).reshape(T, B, 3 * H)
    gib_ref[...] = (
        jnp.dot(x_flat, wih_b_ref[...], preferred_element_type=f32) + bih_b_ref[...]
    ).reshape(T, B, 3 * H)

    whh = whh_ref[...]                                   # loaded once
    wdtype = whh.dtype
    bhh = jnp.broadcast_to(bhh_ref[...], (B, 6 * H))     # hoisted broadcast

    def gru_gates(gi, gh, h_prev):
        # PyTorch GRU cell semantics (gate order r, z, n; b_hn inside r*(...)).
        r = jax.nn.sigmoid(gi[:, 0:H] + gh[:, 0:H])
        z = jax.nn.sigmoid(gi[:, H:2 * H] + gh[:, H:2 * H])
        n = jnp.tanh(gi[:, 2 * H:3 * H] + r * gh[:, 2 * H:3 * H])
        return (1.0 - z) * n + z * h_prev

    # -------- phase 2: serial recurrence, one fused MXU call per step ----------
    def rnn_body(t, h_cat):                              # h_cat = [h_f | h_b] (B, 2H)
        tb = T - 1 - t
        gh = jnp.dot(h_cat.astype(wdtype), whh, preferred_element_type=f32) + bhh
        h_f = gru_gates(gif_ref[t], gh[:, 0:3 * H], h_cat[:, 0:H])
        h_b = gru_gates(gib_ref[tb], gh[:, 3 * H:6 * H], h_cat[:, H:2 * H])
        hidf_ref[t] = h_f
        hidb_ref[tb] = h_b
        return jnp.concatenate([h_f, h_b], axis=-1)

    h0 = jnp.zeros((B, 2 * H), f32)
    unroll = T if T <= 32 else 4
    jax.lax.fori_loop(0, T, rnn_body, h0, unroll=unroll)

    # -------- phase 3: SequenceWise Linear as one lane-dense slab matmul -------
    wfc = wfc_ref[...]
    hf = hidf_ref[...].reshape(T * B, H).astype(wdtype)
    hb = hidb_ref[...].reshape(T * B, H).astype(wdtype)
    out = (
        jnp.dot(hf, wfc[0:H, :], preferred_element_type=f32)
        + jnp.dot(hb, wfc[H:2 * H, :], preferred_element_type=f32)
        + bfc_ref[...]
    )
    out_ref[...] = out.reshape(T, B, Cp)


# -----------------------------------------------------------------------------
# Wrapper: layout / padding / weight fusion + pallas_call
# -----------------------------------------------------------------------------
def batch_rnn_forward(x, params, *, b_tile=8, matmul_dtype=jnp.float32):
    """x: (B, T, input_size) f32 -> (B, T, num_classes) f32.

    matmul_dtype: keep f32 for exact parity with the f32 reference; on v6e/v7x
    jnp.bfloat16 halves VMEM/HBM traffic for the matmul operands (accumulation
    stays f32 via preferred_element_type).  On v5e keep f32.
    """
    B, T, D = x.shape
    H = params["whh_f"].shape[1]
    C = params["wfc"].shape[0]
    f32 = jnp.float32
    wdt = matmul_dtype

    LANES = 128
    Cp = ((C + LANES - 1) // LANES) * LANES              # lane-dense FC output
    B_pad = ((B + b_tile - 1) // b_tile) * b_tile        # fill sublanes / grid tiles

    # time-major, batch padded
    x_tbd = jnp.transpose(x, (1, 0, 2)).astype(wdt)
    if B_pad != B:
        x_tbd = jnp.pad(x_tbd, ((0, 0), (0, B_pad - B), (0, 0)))

    wih_f = params["wih_f"].T.astype(wdt)                # (D, 3H)
    wih_b = params["wih_b"].T.astype(wdt)
    bih_f = params["bih_f"][None, :].astype(f32)
    bih_b = params["bih_b"][None, :].astype(f32)

    # block-diagonal hidden->gates weight: both directions share one MXU call/step
    whh_blk = jnp.zeros((2 * H, 6 * H), wdt)
    whh_blk = whh_blk.at[:H, :3 * H].set(params["whh_f"].T.astype(wdt))
    whh_blk = whh_blk.at[H:, 3 * H:].set(params["whh_b"].T.astype(wdt))
    bhh = jnp.concatenate([params["bhh_f"], params["bhh_b"]])[None, :].astype(f32)

    wfc = jnp.zeros((2 * H, Cp), wdt).at[:, :C].set(params["wfc"].T.astype(wdt))
    bfc = jnp.zeros((1, Cp), f32).at[0, :C].set(params["bfc"].astype(f32))

    # per-program VMEM residency estimate -> explicit scoped-VMEM limit
    f32sz, wsz = 4, jnp.dtype(wdt).itemsize
    vmem_est = (
        2 * wsz * T * b_tile * D                         # x tile, double-buffered
        + 2 * f32sz * T * b_tile * Cp                    # out tile, double-buffered
        + f32sz * T * b_tile * (6 * H + 2 * H)           # gi + hidden scratches
        + wsz * (2 * D * 3 * H + 2 * H * 6 * H + 2 * H * Cp)
        + f32sz * (6 * H + 6 * H + Cp)
    )
    vmem_limit = int(min(max(2 * vmem_est, 16 << 20), 64 << 20))

    def full2(r, c):
        return pl.BlockSpec((r, c), lambda b: (0, 0))

    out_tbc = pl.pallas_call(
        gru_fc_kernel,
        out_shape=jax.ShapeDtypeStruct((T, B_pad, Cp), f32),
        grid=(B_pad // b_tile,),
        in_specs=[
            pl.BlockSpec((T, b_tile, D), lambda b: (0, b, 0)),
            full2(D, 3 * H), full2(1, 3 * H),
            full2(D, 3 * H), full2(1, 3 * H),
            full2(2 * H, 6 * H), full2(1, 6 * H),
            full2(2 * H, Cp), full2(1, Cp),
        ],
        out_specs=pl.BlockSpec((T, b_tile, Cp), lambda b: (0, b, 0)),
        scratch_shapes=[
            pltpu.VMEM((T, b_tile, 3 * H), f32),
            pltpu.VMEM((T, b_tile, 3 * H), f32),
            pltpu.VMEM((T, b_tile, H), f32),
            pltpu.VMEM((T, b_tile, H), f32),
        ],
        compiler_params=pltpu.CompilerParams(
            dimension_semantics=("parallel",),
            vmem_limit_bytes=vmem_limit,
        ),
    )(x_tbd, wih_f, bih_f, wih_b, bih_b, whh_blk, bhh, wfc, bfc)

    # back to batch-first, drop batch/class padding
    return jnp.transpose(out_tbc, (1, 0, 2))[:B, :, :C]


# -----------------------------------------------------------------------------
# Deterministic parameter init (PyTorch-style uniform(-1/sqrt(H), 1/sqrt(H)))
# -----------------------------------------------------------------------------
def init_params(key, input_size, hidden_size, num_classes):
    k = 1.0 / math.sqrt(hidden_size)
    keys = jax.random.split(key, 10)
    u = lambda kk, shape: jax.random.uniform(kk, shape, jnp.float32, -k, k)
    H = hidden_size
    return dict(
        wih_f=u(keys[0], (3 * H, input_size)),
        whh_f=u(keys[1], (3 * H, H)),
        bih_f=u(keys[2], (3 * H,)),
        bhh_f=u(keys[3], (3 * H,)),
        wih_b=u(keys[4], (3 * H, input_size)),
        whh_b=u(keys[5], (3 * H, H)),
        bih_b=u(keys[6], (3 * H,)),
        bhh_b=u(keys[7], (3 * H,)),
        wfc=u(keys[8], (num_classes, 2 * H)),
        bfc=u(keys[9], (num_classes,)),
    )


# -----------------------------------------------------------------------------
# Pure-JAX reference (PyTorch GRU semantics) for correctness checking
# -----------------------------------------------------------------------------
def _gru_dir_ref(x, wih, whh, bih, bhh, reverse=False):
    B, T, _ = x.shape
    H = whh.shape[1]
    xs = jnp.transpose(x, (1, 0, 2))
    if reverse:
        xs = xs[::-1]

    def step(h, x_t):
        gi = jnp.dot(x_t, wih.T, preferred_element_type=jnp.float32) + bih
        gh = jnp.dot(h, whh.T, preferred_element_type=jnp.float32) + bhh
        r = jax.nn.sigmoid(gi[:, :H] + gh[:, :H])
        z = jax.nn.sigmoid(gi[:, H:2 * H] + gh[:, H:2 * H])
        n = jnp.tanh(gi[:, 2 * H:] + r * gh[:, 2 * H:])
        h_new = (1.0 - z) * n + z * h
        return h_new, h_new

    _, hs = jax.lax.scan(step, jnp.zeros((B, H), jnp.float32), xs)
    if reverse:
        hs = hs[::-1]
    return jnp.transpose(hs, (1, 0, 2))


def batch_rnn_ref(x, p):
    hf = _gru_dir_ref(x, p["wih_f"], p["whh_f"], p["bih_f"], p["bhh_f"], reverse=False)
    hb = _gru_dir_ref(x, p["wih_b"], p["whh_b"], p["bih_b"], p["bhh_b"], reverse=True)
    h = jnp.concatenate([hf, hb], axis=-1)
    return jnp.dot(h, p["wfc"].T, preferred_element_type=jnp.float32) + p["bfc"]


# -----------------------------------------------------------------------------
if __name__ == "__main__":
    # TODO(synk): nn.GRU's inter-layer dropout is a no-op here (num_layers=1, dropout=0.0).
    B, T, INPUT_SIZE, HIDDEN, NUM_CLASSES = 2, 8, 16, 32, 10

    key = jax.random.PRNGKey(0)
    kx, kp = jax.random.split(key)
    x = jax.random.normal(kx, (B, T, INPUT_SIZE), jnp.float32)
    params = init_params(kp, INPUT_SIZE, HIDDEN, NUM_CLASSES)

    out = jax.block_until_ready(jax.jit(batch_rnn_forward)(x, params))
    ref = jax.block_until_ready(batch_rnn_ref(x, params))

    assert out.shape == (B, T, NUM_CLASSES), out.shape
    if not np.allclose(np.asarray(out), np.asarray(ref), rtol=2e-2, atol=2e-2):
        raise AssertionError("Pallas kernel output does not match JAX reference")

    print("KERNEL_OK")
</pallas_src>

<mosaic_0001>
module attributes {stable_mosaic.version = 11 : i64} {
  func.func @gru_fc_kernel(%arg0: i32, %arg1: memref<8x8x16xf32, #tpu.memory_space<vmem>>, %arg2: memref<16x96xf32, #tpu.memory_space<vmem>>, %arg3: memref<1x96xf32, #tpu.memory_space<vmem>>, %arg4: memref<16x96xf32, #tpu.memory_space<vmem>>, %arg5: memref<1x96xf32, #tpu.memory_space<vmem>>, %arg6: memref<64x192xf32, #tpu.memory_space<vmem>>, %arg7: memref<1x192xf32, #tpu.memory_space<vmem>>, %arg8: memref<64x128xf32, #tpu.memory_space<vmem>>, %arg9: memref<1x128xf32, #tpu.memory_space<vmem>>, %arg10: memref<8x8x128xf32, #tpu.memory_space<vmem>>, %arg11: memref<8x8x96xf32, #tpu.memory_space<vmem>>, %arg12: memref<8x8x96xf32, #tpu.memory_space<vmem>>, %arg13: memref<8x8x32xf32, #tpu.memory_space<vmem>>, %arg14: memref<8x8x32xf32, #tpu.memory_space<vmem>>) attributes {dimension_semantics = [#tpu.dimension_semantics<parallel>], iteration_bounds = array<i64: 1>, scalar_prefetch = 0 : i64, scratch_operands = 4 : i64, tpu.core_type = #tpu.core_type<tc>, window_params = [{transform_indices = @transform_0, window_bounds = array<i64: 8, 8, 16>}, {pipeline_mode = #tpu.pipeline_mode<synchronous>, transform_indices = @transform_1, window_bounds = array<i64: 16, 96>}, {pipeline_mode = #tpu.pipeline_mode<synchronous>, transform_indices = @transform_2, window_bounds = array<i64: 1, 96>}, {pipeline_mode = #tpu.pipeline_mode<synchronous>, transform_indices = @transform_3, window_bounds = array<i64: 16, 96>}, {pipeline_mode = #tpu.pipeline_mode<synchronous>, transform_indices = @transform_4, window_bounds = array<i64: 1, 96>}, {pipeline_mode = #tpu.pipeline_mode<synchronous>, transform_indices = @transform_5, window_bounds = array<i64: 64, 192>}, {pipeline_mode = #tpu.pipeline_mode<synchronous>, transform_indices = @transform_6, window_bounds = array<i64: 1, 192>}, {pipeline_mode = #tpu.pipeline_mode<synchronous>, transform_indices = @transform_7, window_bounds = array<i64: 64, 128>}, {pipeline_mode = #tpu.pipeline_mode<synchronous>, transform_indices = @transform_8, window_bounds = array<i64: 1, 128>}, {transform_indices = @transform_9, window_bounds = array<i64: 8, 8, 128>}]} {
    %c0 = arith.constant 0 : index
    %c0_0 = arith.constant 0 : index
    %c0_1 = arith.constant 0 : index
    %0 = vector.load %arg1[%c0, %c0_0, %c0_1] : memref<8x8x16xf32, #tpu.memory_space<vmem>>, vector<8x8x16xf32>
    %1 = vector.shape_cast %0 : vector<8x8x16xf32> to vector<64x16xf32>
    %c0_2 = arith.constant 0 : index
    %c0_3 = arith.constant 0 : index
    %2 = vector.load %arg2[%c0_2, %c0_3] : memref<16x96xf32, #tpu.memory_space<vmem>>, vector<16x96xf32>
    %cst = arith.constant dense<0.000000e+00> : vector<64x96xf32>
    %3 = tpu.matmul %1, %2, %cst {dimension_numbers = #tpu.dot_dimension_numbers<[1], [0], [0], [1], [0, 0, 1, 1], [], []>} : vector<64x16xf32>, vector<16x96xf32>, vector<64x96xf32> -> vector<64x96xf32>
    %c0_4 = arith.constant 0 : index
    %c0_5 = arith.constant 0 : index
    %4 = vector.load %arg3[%c0_4, %c0_5] : memref<1x96xf32, #tpu.memory_space<vmem>>, vector<1x96xf32>
    %5 = vector.broadcast %4 : vector<1x96xf32> to vector<64x96xf32>
    %6 = arith.addf %3, %5 : vector<64x96xf32>
    %7 = vector.shape_cast %6 : vector<64x96xf32> to vector<8x8x96xf32>
    %c0_6 = arith.constant 0 : index
    %c0_7 = arith.constant 0 : index
    %c0_8 = arith.constant 0 : index
    %8 = vector.load %arg11[%c0_6, %c0_7, %c0_8] : memref<8x8x96xf32, #tpu.memory_space<vmem>>, vector<8x8x96xf32>
    tpu.vector_store %arg11[%c0_6, %c0_7, %c0_8], %7 {strides = array<i32>} : memref<8x8x96xf32, #tpu.memory_space<vmem>>, vector<8x8x96xf32>,
    %c0_9 = arith.constant 0 : index
    %c0_10 = arith.constant 0 : index
    %9 = vector.load %arg4[%c0_9, %c0_10] : memref<16x96xf32, #tpu.memory_space<vmem>>, vector<16x96xf32>
    %cst_11 = arith.constant dense<0.000000e+00> : vector<64x96xf32>
    %10 = tpu.matmul %1, %9, %cst_11 {dimension_numbers = #tpu.dot_dimension_numbers<[1], [0], [0], [1], [0, 0, 1, 1], [], []>} : vector<64x16xf32>, vector<16x96xf32>, vector<64x96xf32> -> vector<64x96xf32>
    %c0_12 = arith.constant 0 : index
    %c0_13 = arith.constant 0 : index
    %11 = vector.load %arg5[%c0_12, %c0_13] : memref<1x96xf32, #tpu.memory_space<vmem>>, vector<1x96xf32>
    %12 = vector.broadcast %11 : vector<1x96xf32> to vector<64x96xf32>
    %13 = arith.addf %10, %12 : vector<64x96xf32>
    %14 = vector.shape_cast %13 : vector<64x96xf32> to vector<8x8x96xf32>
    %c0_14 = arith.constant 0 : index
    %c0_15 = arith.constant 0 : index
    %c0_16 = arith.constant 0 : index
    %15 = vector.load %arg12[%c0_14, %c0_15, %c0_16] : memref<8x8x96xf32, #tpu.memory_space<vmem>>, vector<8x8x96xf32>
    tpu.vector_store %arg12[%c0_14, %c0_15, %c0_16], %14 {strides = array<i32>} : memref<8x8x96xf32, #tpu.memory_space<vmem>>, vector<8x8x96xf32>,
    %c0_17 = arith.constant 0 : index
    %c0_18 = arith.constant 0 : index
    %16 = vector.load %arg6[%c0_17, %c0_18] : memref<64x192xf32, #tpu.memory_space<vmem>>, vector<64x192xf32>
    %c0_19 = arith.constant 0 : index
    %c0_20 = arith.constant 0 : index
    %17 = vector.load %arg7[%c0_19, %c0_20] : memref<1x192xf32, #tpu.memory_space<vmem>>, vector<1x192xf32>
    %18 = vector.shape_cast %17 : vector<1x192xf32> to vector<1x192xf32>
    %19 = vector.broadcast %18 : vector<1x192xf32> to vector<8x192xf32>
    %cst_21 = arith.constant 0.000000e+00 : f32
    %20 = vector.broadcast %cst_21 : f32 to vector<8x64xf32>
    %c0_i32 = arith.constant 0 : i32
    %c7_i32 = arith.constant 7 : i32
    %21 = arith.subi %c7_i32, %c0_i32 : i32
    %cst_22 = arith.constant dense<0.000000e+00> : vector<8x192xf32>
    %22 = tpu.matmul %20, %16, %cst_22 {dimension_numbers = #tpu.dot_dimension_numbers<[1], [0], [0], [1], [0, 0, 1, 1], [], []>} : vector<8x64xf32>, vector<64x192xf32>, vector<8x192xf32> -> vector<8x192xf32>
    %23 = arith.addf %22, %19 : vector<8x192xf32>
    %24 = arith.index_cast %c0_i32 : i32 to index
    %c0_23 = arith.constant 0 : index
    %c0_24 = arith.constant 0 : index
    %25 = vector.load %arg11[%24, %c0_23, %c0_24] : memref<8x8x96xf32, #tpu.memory_space<vmem>>, vector<1x8x96xf32>
    %26 = vector.shape_cast %25 : vector<1x8x96xf32> to vector<8x96xf32>
    %27 = vector.extract_strided_slice %23 {offsets = [0, 0], sizes = [8, 96], strides = [1, 1]} : vector<8x192xf32> to vector<8x96xf32>
    %28 = vector.extract_strided_slice %20 {offsets = [0, 0], sizes = [8, 32], strides = [1, 1]} : vector<8x64xf32> to vector<8x32xf32>
    %29 = vector.extract_strided_slice %26 {offsets = [0, 0], sizes = [8, 32], strides = [1, 1]} : vector<8x96xf32> to vector<8x32xf32>
    %30 = vector.extract_strided_slice %27 {offsets = [0, 0], sizes = [8, 32], strides = [1, 1]} : vector<8x96xf32> to vector<8x32xf32>
    %31 = arith.addf %29, %30 : vector<8x32xf32>
    %32 = arith.negf %31 : vector<8x32xf32>
    %33 = math.exp %32 : vector<8x32xf32>
    %cst_25 = arith.constant 1.000000e+00 : f32
    %34 = vector.broadcast %cst_25 : f32 to vector<8x32xf32>
    %35 = arith.addf %34, %33 : vector<8x32xf32>
    %36 = arith.divf %34, %35 : vector<8x32xf32>
    %37 = vector.extract_strided_slice %26 {offsets = [0, 32], sizes = [8, 32], strides = [1, 1]} : vector<8x96xf32> to vector<8x32xf32>
    %38 = vector.extract_strided_slice %27 {offsets = [0, 32], sizes = [8, 32], strides = [1, 1]} : vector<8x96xf32> to vector<8x32xf32>
    %39 = arith.addf %37, %38 : vector<8x32xf32>
    %40 = arith.negf %39 : vector<8x32xf32>
    %41 = math.exp %40 : vector<8x32xf32>
    %cst_26 = arith.constant 1.000000e+00 : f32
    %42 = vector.broadcast %cst_26 : f32 to vector<8x32xf32>
    %43 = arith.addf %42, %41 : vector<8x32xf32>
    %44 = arith.divf %42, %43 : vector<8x32xf32>
    %45 = vector.extract_strided_slice %26 {offsets = [0, 64], sizes = [8, 32], strides = [1, 1]} : vector<8x96xf32> to vector<8x32xf32>
    %46 = vector.extract_strided_slice %27 {offsets = [0, 64], sizes = [8, 32], strides = [1, 1]} : vector<8x96xf32> to vector<8x32xf32>
    %47 = arith.mulf %36, %46 : vector<8x32xf32>
    %48 = arith.addf %45, %47 : vector<8x32xf32>
    %49 = math.tanh %48 : vector<8x32xf32>
    %cst_27 = arith.constant 1.000000e+00 : f32
    %50 = vector.broadcast %cst_27 : f32 to vector<8x32xf32>
    %51 = arith.subf %50, %44 : vector<8x32xf32>
    %52 = arith.mulf %51, %49 : vector<8x32xf32>
    %53 = arith.mulf %44, %28 : vector<8x32xf32>
    %54 = arith.addf %52, %53 : vector<8x32xf32>
    %55 = arith.index_cast %21 : i32 to index
    %c0_28 = arith.constant 0 : index
    %c0_29 = arith.constant 0 : index
    %56 = vector.load %arg12[%55, %c0_28, %c0_29] : memref<8x8x96xf32, #tpu.memory_space<vmem>>, vector<1x8x96xf32>
    %57 = vector.shape_cast %56 : vector<1x8x96xf32> to vector<8x96xf32>
    %58 = vector.extract_strided_slice %23 {offsets = [0, 96], sizes = [8, 96], strides = [1, 1]} : vector<8x192xf32> to vector<8x96xf32>
    %59 = vector.extract_strided_slice %20 {offsets = [0, 32], sizes = [8, 32], strides = [1, 1]} : vector<8x64xf32> to vector<8x32xf32>
    %60 = vector.extract_strided_slice %57 {offsets = [0, 0], sizes = [8, 32], strides = [1, 1]} : vector<8x96xf32> to vector<8x32xf32>
    %61 = vector.extract_strided_slice %58 {offsets = [0, 0], sizes = [8, 32], strides = [1, 1]} : vector<8x96xf32> to vector<8x32xf32>
    %62 = arith.addf %60, %61 : vector<8x32xf32>
    %63 = arith.negf %62 : vector<8x32xf32>
    %64 = math.exp %63 : vector<8x32xf32>
    %cst_30 = arith.constant 1.000000e+00 : f32
    %65 = vector.broadcast %cst_30 : f32 to vector<8x32xf32>
    %66 = arith.addf %65, %64 : vector<8x32xf32>
    %67 = arith.divf %65, %66 : vector<8x32xf32>
    %68 = vector.extract_strided_slice %57 {offsets = [0, 32], sizes = [8, 32], strides = [1, 1]} : vector<8x96xf32> to vector<8x32xf32>
    %69 = vector.extract_strided_slice %58 {offsets = [0, 32], sizes = [8, 32], strides = [1, 1]} : vector<8x96xf32> to vector<8x32xf32>
    %70 = arith.addf %68, %69 : vector<8x32xf32>
    %71 = arith.negf %70 : vector<8x32xf32>
    %72 = math.exp %71 : vector<8x32xf32>
    %cst_31 = arith.constant 1.000000e+00 : f32
    %73 = vector.broadcast %cst_31 : f32 to vector<8x32xf32>
    %74 = arith.addf %73, %72 : vector<8x32xf32>
    %75 = arith.divf %73, %74 : vector<8x32xf32>
    %76 = vector.extract_strided_slice %57 {offsets = [0, 64], sizes = [8, 32], strides = [1, 1]} : vector<8x96xf32> to vector<8x32xf32>
    %77 = vector.extract_strided_slice %58 {offsets = [0, 64], sizes = [8, 32], strides = [1, 1]} : vector<8x96xf32> to vector<8x32xf32>
    %78 = arith.mulf %67, %77 : vector<8x32xf32>
    %79 = arith.addf %76, %78 : vector<8x32xf32>
    %80 = math.tanh %79 : vector<8x32xf32>
    %cst_32 = arith.constant 1.000000e+00 : f32
    %81 = vector.broadcast %cst_32 : f32 to vector<8x32xf32>
    %82 = arith.subf %81, %75 : vector<8x32xf32>
    %83 = arith.mulf %82, %80 : vector<8x32xf32>
    %84 = arith.mulf %75, %59 : vector<8x32xf32>
    %85 = arith.addf %83, %84 : vector<8x32xf32>
    %86 = arith.index_cast %c0_i32 : i32 to index
    %c0_33 = arith.constant 0 : index
    %c0_34 = arith.constant 0 : index
    %87 = vector.load %arg13[%86, %c0_33, %c0_34] : memref<8x8x32xf32, #tpu.memory_space<vmem>>, vector<1x8x32xf32>
    %88 = vector.shape_cast %87 : vector<1x8x32xf32> to vector<8x32xf32>
    %89 = vector.shape_cast %54 : vector<8x32xf32> to vector<1x8x32xf32>
    tpu.vector_store %arg13[%86, %c0_33, %c0_34], %89 {strides = array<i32>} : memref<8x8x32xf32, #tpu.memory_space<vmem>>, vector<1x8x32xf32>,
    %90 = arith.index_cast %21 : i32 to index
    %c0_35 = arith.constant 0 : index
    %c0_36 = arith.constant 0 : index
    %91 = vector.load %arg14[%90, %c0_35, %c0_36] : memref<8x8x32xf32, #tpu.memory_space<vmem>>, vector<1x8x32xf32>
    %92 = vector.shape_cast %91 : vector<1x8x32xf32> to vector<8x32xf32>
    %93 = vector.shape_cast %85 : vector<8x32xf32> to vector<1x8x32xf32>
    tpu.vector_store %arg14[%90, %c0_35, %c0_36], %93 {strides = array<i32>} : memref<8x8x32xf32, #tpu.memory_space<vmem>>, vector<1x8x32xf32>,
    %94 = tpu.concatenate %54, %85 in 1 : vector<8x32xf32>, vector<8x32xf32> -> vector<8x64xf32>
    %c1_i32 = arith.constant 1 : i32
    %c7_i32_37 = arith.constant 7 : i32
    %95 = arith.subi %c7_i32_37, %c1_i32 : i32
    %cst_38 = arith.constant dense<0.000000e+00> : vector<8x192xf32>
    %96 = tpu.matmul %94, %16, %cst_38 {dimension_numbers = #tpu.dot_dimension_numbers<[1], [0], [0], [1], [0, 0, 1, 1], [], []>} : vector<8x64xf32>, vector<64x192xf32>, vector<8x192xf32> -> vector<8x192xf32>
    %97 = arith.addf %96, %19 : vector<8x192xf32>
    %98 = arith.index_cast %c1_i32 : i32 to index
    %c0_39 = arith.constant 0 : index
    %c0_40 = arith.constant 0 : index
    %99 = vector.load %arg11[%98, %c0_39, %c0_40] : memref<8x8x96xf32, #tpu.memory_space<vmem>>, vector<1x8x96xf32>
    %100 = vector.shape_cast %99 : vector<1x8x96xf32> to vector<8x96xf32>
    %101 = vector.extract_strided_slice %97 {offsets = [0, 0], sizes = [8, 96], strides = [1, 1]} : vector<8x192xf32> to vector<8x96xf32>
    %102 = vector.extract_strided_slice %94 {offsets = [0, 0], sizes = [8, 32], strides = [1, 1]} : vector<8x64xf32> to vector<8x32xf32>
    %103 = vector.extract_strided_slice %100 {offsets = [0, 0], sizes = [8, 32], strides = [1, 1]} : vector<8x96xf32> to vector<8x32xf32>
    %104 = vector.extract_strided_slice %101 {offsets = [0, 0], sizes = [8, 32], strides = [1, 1]} : vector<8x96xf32> to vector<8x32xf32>
    %105 = arith.addf %103, %104 : vector<8x32xf32>
    %106 = arith.negf %105 : vector<8x32xf32>
    %107 = math.exp %106 : vector<8x32xf32>
    %cst_41 = arith.constant 1.000000e+00 : f32
    %108 = vector.broadcast %cst_41 : f32 to vector<8x32xf32>
    %109 = arith.addf %108, %107 : vector<8x32xf32>
    %110 = arith.divf %108, %109 : vector<8x32xf32>
    %111 = vector.extract_strided_slice %100 {offsets = [0, 32], sizes = [8, 32], strides = [1, 1]} : vector<8x96xf32> to vector<8x32xf32>
    %112 = vector.extract_strided_slice %101 {offsets = [0, 32], sizes = [8, 32], strides = [1, 1]} : vector<8x96xf32> to vector<8x32xf32>
    %113 = arith.addf %111, %112 : vector<8x32xf32>
    %114 = arith.negf %113 : vector<8x32xf32>
    %115 = math.exp %114 : vector<8x32xf32>
    %cst_42 = arith.constant 1.000000e+00 : f32
    %116 = vector.broadcast %cst_42 : f32 to vector<8x32xf32>
    %117 = arith.addf %116, %115 : vector<8x32xf32>
    %118 = arith.divf %116, %117 : vector<8x32xf32>
    %119 = vector.extract_strided_slice %100 {offsets = [0, 64], sizes = [8, 32], strides = [1, 1]} : vector<8x96xf32> to vector<8x32xf32>
    %120 = vector.extract_strided_slice %101 {offsets = [0, 64], sizes = [8, 32], strides = [1, 1]} : vector<8x96xf32> to vector<8x32xf32>
    %121 = arith.mulf %110, %120 : vector<8x32xf32>
    %122 = arith.addf %119, %121 : vector<8x32xf32>
    %123 = math.tanh %122 : vector<8x32xf32>
    %cst_43 = arith.constant 1.000000e+00 : f32
    %124 = vector.broadcast %cst_43 : f32 to vector<8x32xf32>
    %125 = arith.subf %124, %118 : vector<8x32xf32>
    %126 = arith.mulf %125, %123 : vector<8x32xf32>
    %127 = arith.mulf %118, %102 : vector<8x32xf32>
    %128 = arith.addf %126, %127 : vector<8x32xf32>
    %129 = arith.index_cast %95 : i32 to index
    %c0_44 = arith.constant 0 : index
    %c0_45 = arith.constant 0 : index
    %130 = vector.load %arg12[%129, %c0_44, %c0_45] : memref<8x8x96xf32, #tpu.memory_space<vmem>>, vector<1x8x96xf32>
    %131 = vector.shape_cast %130 : vector<1x8x96xf32> to vector<8x96xf32>
    %132 = vector.extract_strided_slice %97 {offsets = [0, 96], sizes = [8, 96], strides = [1, 1]} : vector<8x192xf32> to vector<8x96xf32>
    %133 = vector.extract_strided_slice %94 {offsets = [0, 32], sizes = [8, 32], strides = [1, 1]} : vector<8x64xf32> to vector<8x32xf32>
    %134 = vector.extract_strided_slice %131 {offsets = [0, 0], sizes = [8, 32], strides = [1, 1]} : vector<8x96xf32> to vector<8x32xf32>
    %135 = vector.extract_strided_slice %132 {offsets = [0, 0], sizes = [8, 32], strides = [1, 1]} : vector<8x96xf32> to vector<8x32xf32>
    %136 = arith.addf %134, %135 : vector<8x32xf32>
    %137 = arith.negf %136 : vector<8x32xf32>
    %138 = math.exp %137 : vector<8x32xf32>
    %cst_46 = arith.constant 1.000000e+00 : f32
    %139 = vector.broadcast %cst_46 : f32 to vector<8x32xf32>
    %140 = arith.addf %139, %138 : vector<8x32xf32>
    %141 = arith.divf %139, %140 : vector<8x32xf32>
    %142 = vector.extract_strided_slice %131 {offsets = [0, 32], sizes = [8, 32], strides = [1, 1]} : vector<8x96xf32> to vector<8x32xf32>
    %143 = vector.extract_strided_slice %132 {offsets = [0, 32], sizes = [8, 32], strides = [1, 1]} : vector<8x96xf32> to vector<8x32xf32>
    %144 = arith.addf %142, %143 : vector<8x32xf32>
    %145 = arith.negf %144 : vector<8x32xf32>
    %146 = math.exp %145 : vector<8x32xf32>
    %cst_47 = arith.constant 1.000000e+00 : f32
    %147 = vector.broadcast %cst_47 : f32 to vector<8x32xf32>
    %148 = arith.addf %147, %146 : vector<8x32xf32>
    %149 = arith.divf %147, %148 : vector<8x32xf32>
    %150 = vector.extract_strided_slice %131 {offsets = [0, 64], sizes = [8, 32], strides = [1, 1]} : vector<8x96xf32> to vector<8x32xf32>
    %151 = vector.extract_strided_slice %132 {offsets = [0, 64], sizes = [8, 32], strides = [1, 1]} : vector<8x96xf32> to vector<8x32xf32>
    %152 = arith.mulf %141, %151 : vector<8x32xf32>
    %153 = arith.addf %150, %152 : vector<8x32xf32>
    %154 = math.tanh %153 : vector<8x32xf32>
    %cst_48 = arith.constant 1.000000e+00 : f32
    %155 = vector.broadcast %cst_48 : f32 to vector<8x32xf32>
    %156 = arith.subf %155, %149 : vector<8x32xf32>
    %157 = arith.mulf %156, %154 : vector<8x32xf32>
    %158 = arith.mulf %149, %133 : vector<8x32xf32>
    %159 = arith.addf %157, %158 : vector<8x32xf32>
    %160 = arith.index_cast %c1_i32 : i32 to index
    %c0_49 = arith.constant 0 : index
    %c0_50 = arith.constant 0 : index
    %161 = vector.load %arg13[%160, %c0_49, %c0_50] : memref<8x8x32xf32, #tpu.memory_space<vmem>>, vector<1x8x32xf32>
    %162 = vector.shape_cast %161 : vector<1x8x32xf32> to vector<8x32xf32>
    %163 = vector.shape_cast %128 : vector<8x32xf32> to vector<1x8x32xf32>
    tpu.vector_store %arg13[%160, %c0_49, %c0_50], %163 {strides = array<i32>} : memref<8x8x32xf32, #tpu.memory_space<vmem>>, vector<1x8x32xf32>,
    %164 = arith.index_cast %95 : i32 to index
    %c0_51 = arith.constant 0 : index
    %c0_52 = arith.constant 0 : index
    %165 = vector.load %arg14[%164, %c0_51, %c0_52] : memref<8x8x32xf32, #tpu.memory_space<vmem>>, vector<1x8x32xf32>
    %166 = vector.shape_cast %165 : vector<1x8x32xf32> to vector<8x32xf32>
    %167 = vector.shape_cast %159 : vector<8x32xf32> to vector<1x8x32xf32>
    tpu.vector_store %arg14[%164, %c0_51, %c0_52], %167 {strides = array<i32>} : memref<8x8x32xf32, #tpu.memory_space<vmem>>, vector<1x8x32xf32>,
    %168 = tpu.concatenate %128, %159 in 1 : vector<8x32xf32>, vector<8x32xf32> -> vector<8x64xf32>
    %c2_i32 = arith.constant 2 : i32
    %c7_i32_53 = arith.constant 7 : i32
    %169 = arith.subi %c7_i32_53, %c2_i32 : i32
    %cst_54 = arith.constant dense<0.000000e+00> : vector<8x192xf32>
    %170 = tpu.matmul %168, %16, %cst_54 {dimension_numbers = #tpu.dot_dimension_numbers<[1], [0], [0], [1], [0, 0, 1, 1], [], []>} : vector<8x64xf32>, vector<64x192xf32>, vector<8x192xf32> -> vector<8x192xf32>
    %171 = arith.addf %170, %19 : vector<8x192xf32>
    %172 = arith.index_cast %c2_i32 : i32 to index
    %c0_55 = arith.constant 0 : index
    %c0_56 = arith.constant 0 : index
    %173 = vector.load %arg11[%172, %c0_55, %c0_56] : memref<8x8x96xf32, #tpu.memory_space<vmem>>, vector<1x8x96xf32>
    %174 = vector.shape_cast %173 : vector<1x8x96xf32> to vector<8x96xf32>
    %175 = vector.extract_strided_slice %171 {offsets = [0, 0], sizes = [8, 96], strides = [1, 1]} : vector<8x192xf32> to vector<8x96xf32>
    %176 = vector.extract_strided_slice %168 {offsets = [0, 0], sizes = [8, 32], strides = [1, 1]} : vector<8x64xf32> to vector<8x32xf32>
    %177 = vector.extract_strided_slice %174 {offsets = [0, 0], sizes = [8, 32], strides = [1, 1]} : vector<8x96xf32> to vector<8x32xf32>
    %178 = vector.extract_strided_slice %175 {offsets = [0, 0], sizes = [8, 32], strides = [1, 1]} : vector<8x96xf32> to vector<8x32xf32>
    %179 = arith.addf %177, %178 : vector<8x32xf32>
    %180 = arith.negf %179 : vector<8x32xf32>
    %181 = math.exp %180 : vector<8x32xf32>
    %cst_57 = arith.constant 1.000000e+00 : f32
    %182 = vector.broadcast %cst_57 : f32 to vector<8x32xf32>
    %183 = arith.addf %182, %181 : vector<8x32xf32>
    %184 = arith.divf %182, %183 : vector<8x32xf32>
    %185 = vector.extract_strided_slice %174 {offsets = [0, 32], sizes = [8, 32], strides = [1, 1]} : vector<8x96xf32> to vector<8x32xf32>
    %186 = vector.extract_strided_slice %175 {offsets = [0, 32], sizes = [8, 32], strides = [1, 1]} : vector<8x96xf32> to vector<8x32xf32>
    %187 = arith.addf %185, %186 : vector<8x32xf32>
    %188 = arith.negf %187 : vector<8x32xf32>
    %189 = math.exp %188 : vector<8x32xf32>
    %cst_58 = arith.constant 1.000000e+00 : f32
    %190 = vector.broadcast %cst_58 : f32 to vector<8x32xf32>
    %191 = arith.addf %190, %189 : vector<8x32xf32>
    %192 = arith.divf %190, %191 : vector<8x32xf32>
    %193 = vector.extract_strided_slice %174 {offsets = [0, 64], sizes = [8, 32], strides = [1, 1]} : vector<8x96xf32> to vector<8x32xf32>
    %194 = vector.extract_strided_slice %175 {offsets = [0, 64], sizes = [8, 32], strides = [1, 1]} : vector<8x96xf32> to vector<8x32xf32>
    %195 = arith.mulf %184, %194 : vector<8x32xf32>
    %196 = arith.addf %193, %195 : vector<8x32xf32>
    %197 = math.tanh %196 : vector<8x32xf32>
    %cst_59 = arith.constant 1.000000e+00 : f32
    %198 = vector.broadcast %cst_59 : f32 to vector<8x32xf32>
    %199 = arith.subf %198, %192 : vector<8x32xf32>
    %200 = arith.mulf %199, %197 : vector<8x32xf32>
    %201 = arith.mulf %192, %176 : vector<8x32xf32>
    %202 = arith.addf %200, %201 : vector<8x32xf32>
    %203 = arith.index_cast %169 : i32 to index
    %c0_60 = arith.constant 0 : index
    %c0_61 = arith.constant 0 : index
    %204 = vector.load %arg12[%203, %c0_60, %c0_61] : memref<8x8x96xf32, #tpu.memory_space<vmem>>, vector<1x8x96xf32>
    %205 = vector.shape_cast %204 : vector<1x8x96xf32> to vector<8x96xf32>
    %206 = vector.extract_strided_slice %171 {offsets = [0, 96], sizes = [8, 96], strides = [1, 1]} : vector<8x192xf32> to vector<8x96xf32>
    %207 = vector.extract_strided_slice %168 {offsets = [0, 32], sizes = [8, 32], strides = [1, 1]} : vector<8x64xf32> to vector<8x32xf32>
    %208 = vector.extract_strided_slice %205 {offsets = [0, 0], sizes = [8, 32], strides = [1, 1]} : vector<8x96xf32> to vector<8x32xf32>
    %209 = vector.extract_strided_slice %206 {offsets = [0, 0], sizes = [8, 32], strides = [1, 1]} : vector<8x96xf32> to vector<8x32xf32>
    %210 = arith.addf %208, %209 : vector<8x32xf32>
    %211 = arith.negf %210 : vector<8x32xf32>
    %212 = math.exp %211 : vector<8x32xf32>
    %cst_62 = arith.constant 1.000000e+00 : f32
    %213 = vector.broadcast %cst_62 : f32 to vector<8x32xf32>
    %214 = arith.addf %213, %212 : vector<8x32xf32>
    %215 = arith.divf %213, %214 : vector<8x32xf32>
    %216 = vector.extract_strided_slice %205 {offsets = [0, 32], sizes = [8, 32], strides = [1, 1]} : vector<8x96xf32> to vector<8x32xf32>
    %217 = vector.extract_strided_slice %206 {offsets = [0, 32], sizes = [8, 32], strides = [1, 1]} : vector<8x96xf32> to vector<8x32xf32>
    %218 = arith.addf %216, %217 : vector<8x32xf32>
    %219 = arith.negf %218 : vector<8x32xf32>
    %220 = math.exp %219 : vector<8x32xf32>
    %cst_63 = arith.constant 1.000000e+00 : f32
    %221 = vector.broadcast %cst_63 : f32 to vector<8x32xf32>
    %222 = arith.addf %221, %220 : vector<8x32xf32>
    %223 = arith.divf %221, %222 : vector<8x32xf32>
    %224 = vector.extract_strided_slice %205 {offsets = [0, 64], sizes = [8, 32], strides = [1, 1]} : vector<8x96xf32> to vector<8x32xf32>
    %225 = vector.extract_strided_slice %206 {offsets = [0, 64], sizes = [8, 32], strides = [1, 1]} : vector<8x96xf32> to vector<8x32xf32>
    %226 = arith.mulf %215, %225 : vector<8x32xf32>
    %227 = arith.addf %224, %226 : vector<8x32xf32>
    %228 = math.tanh %227 : vector<8x32xf32>
    %cst_64 = arith.constant 1.000000e+00 : f32
    %229 = vector.broadcast %cst_64 : f32 to vector<8x32xf32>
    %230 = arith.subf %229, %223 : vector<8x32xf32>
    %231 = arith.mulf %230, %228 : vector<8x32xf32>
    %232 = arith.mulf %223, %207 : vector<8x32xf32>
    %233 = arith.addf %231, %232 : vector<8x32xf32>
    %234 = arith.index_cast %c2_i32 : i32 to index
    %c0_65 = arith.constant 0 : index
    %c0_66 = arith.constant 0 : index
    %235 = vector.load %arg13[%234, %c0_65, %c0_66] : memref<8x8x32xf32, #tpu.memory_space<vmem>>, vector<1x8x32xf32>
    %236 = vector.shape_cast %235 : vector<1x8x32xf32> to vector<8x32xf32>
    %237 = vector.shape_cast %202 : vector<8x32xf32> to vector<1x8x32xf32>
    tpu.vector_store %arg13[%234, %c0_65, %c0_66], %237 {strides = array<i32>} : memref<8x8x32xf32, #tpu.memory_space<vmem>>, vector<1x8x32xf32>,
    %238 = arith.index_cast %169 : i32 to index
    %c0_67 = arith.constant 0 : index
    %c0_68 = arith.constant 0 : index
    %239 = vector.load %arg14[%238, %c0_67, %c0_68] : memref<8x8x32xf32, #tpu.memory_space<vmem>>, vector<1x8x32xf32>
    %240 = vector.shape_cast %239 : vector<1x8x32xf32> to vector<8x32xf32>
    %241 = vector.shape_cast %233 : vector<8x32xf32> to vector<1x8x32xf32>
    tpu.vector_store %arg14[%238, %c0_67, %c0_68], %241 {strides = array<i32>} : memref<8x8x32xf32, #tpu.memory_space<vmem>>, vector<1x8x32xf32>,
    %242 = tpu.concatenate %202, %233 in 1 : vector<8x32xf32>, vector<8x32xf32> -> vector<8x64xf32>
    %c3_i32 = arith.constant 3 : i32
    %c7_i32_69 = arith.constant 7 : i32
    %243 = arith.subi %c7_i32_69, %c3_i32 : i32
    %cst_70 = arith.constant dense<0.000000e+00> : vector<8x192xf32>
    %244 = tpu.matmul %242, %16, %cst_70 {dimension_numbers = #tpu.dot_dimension_numbers<[1], [0], [0], [1], [0, 0, 1, 1], [], []>} : vector<8x64xf32>, vector<64x192xf32>, vector<8x192xf32> -> vector<8x192xf32>
    %245 = arith.addf %244, %19 : vector<8x192xf32>
    %246 = arith.index_cast %c3_i32 : i32 to index
    %c0_71 = arith.constant 0 : index
    %c0_72 = arith.constant 0 : index
    %247 = vector.load %arg11[%246, %c0_71, %c0_72] : memref<8x8x96xf32, #tpu.memory_space<vmem>>, vector<1x8x96xf32>
    %248 = vector.shape_cast %247 : vector<1x8x96xf32> to vector<8x96xf32>
    %249 = vector.extract_strided_slice %245 {offsets = [0, 0], sizes = [8, 96], strides = [1, 1]} : vector<8x192xf32> to vector<8x96xf32>
    %250 = vector.extract_strided_slice %242 {offsets = [0, 0], sizes = [8, 32], strides = [1, 1]} : vector<8x64xf32> to vector<8x32xf32>
    %251 = vector.extract_strided_slice %248 {offsets = [0, 0], sizes = [8, 32], strides = [1, 1]} : vector<8x96xf32> to vector<8x32xf32>
    %252 = vector.extract_strided_slice %249 {offsets = [0, 0], sizes = [8, 32], strides = [1, 1]} : vector<8x96xf32> to vector<8x32xf32>
    %253 = arith.addf %251, %252 : vector<8x32xf32>
    %254 = arith.negf %253 : vector<8x32xf32>
    %255 = math.exp %254 : vector<8x32xf32>
    %cst_73 = arith.constant 1.000000e+00 : f32
    %256 = vector.broadcast %cst_73 : f32 to vector<8x32xf32>
    %257 = arith.addf %256, %255 : vector<8x32xf32>
    %258 = arith.divf %256, %257 : vector<8x32xf32>
    %259 = vector.extract_strided_slice %248 {offsets = [0, 32], sizes = [8, 32], strides = [1, 1]} : vector<8x96xf32> to vector<8x32xf32>
    %260 = vector.extract_strided_slice %249 {offsets = [0, 32], sizes = [8, 32], strides = [1, 1]} : vector<8x96xf32> to vector<8x32xf32>
    %261 = arith.addf %259, %260 : vector<8x32xf32>
    %262 = arith.negf %261 : vector<8x32xf32>
    %263 = math.exp %262 : vector<8x32xf32>
    %cst_74 = arith.constant 1.000000e+00 : f32
    %264 = vector.broadcast %cst_74 : f32 to vector<8x32xf32>
    %265 = arith.addf %264, %263 : vector<8x32xf32>
    %266 = arith.divf %264, %265 : vector<8x32xf32>
    %267 = vector.extract_strided_slice %248 {offsets = [0, 64], sizes = [8, 32], strides = [1, 1]} : vector<8x96xf32> to vector<8x32xf32>
    %268 = vector.extract_strided_slice %249 {offsets = [0, 64], sizes = [8, 32], strides = [1, 1]} : vector<8x96xf32> to vector<8x32xf32>
    %269 = arith.mulf %258, %268 : vector<8x32xf32>
    %270 = arith.addf %267, %269 : vector<8x32xf32>
    %271 = math.tanh %270 : vector<8x32xf32>
    %cst_75 = arith.constant 1.000000e+00 : f32
    %272 = vector.broadcast %cst_75 : f32 to vector<8x32xf32>
    %273 = arith.subf %272, %266 : vector<8x32xf32>
    %274 = arith.mulf %273, %271 : vector<8x32xf32>
    %275 = arith.mulf %266, %250 : vector<8x32xf32>
    %276 = arith.addf %274, %275 : vector<8x32xf32>
    %277 = arith.index_cast %243 : i32 to index
    %c0_76 = arith.constant 0 : index
    %c0_77 = arith.constant 0 : index
    %278 = vector.load %arg12[%277, %c0_76, %c0_77] : memref<8x8x96xf32, #tpu.memory_space<vmem>>, vector<1x8x96xf32>
    %279 = vector.shape_cast %278 : vector<1x8x96xf32> to vector<8x96xf32>
    %280 = vector.extract_strided_slice %245 {offsets = [0, 96], sizes = [8, 96], strides = [1, 1]} : vector<8x192xf32> to vector<8x96xf32>
    %281 = vector.extract_strided_slice %242 {offsets = [0, 32], sizes = [8, 32], strides = [1, 1]} : vector<8x64xf32> to vector<8x32xf32>
    %282 = vector.extract_strided_slice %279 {offsets = [0, 0], sizes = [8, 32], strides = [1, 1]} : vector<8x96xf32> to vector<8x32xf32>
    %283 = vector.extract_strided_slice %280 {offsets = [0, 0], sizes = [8, 32], strides = [1, 1]} : vector<8x96xf32> to vector<8x32xf32>
    %284 = arith.addf %282, %283 : vector<8x32xf32>
    %285 = arith.negf %284 : vector<8x32xf32>
    %286 = math.exp %285 : vector<8x32xf32>
    %cst_78 = arith.constant 1.000000e+00 : f32
    %287 = vector.broadcast %cst_78 : f32 to vector<8x32xf32>
    %288 = arith.addf %287, %286 : vector<8x32xf32>
    %289 = arith.divf %287, %288 : vector<8x32xf32>
    %290 = vector.extract_strided_slice %279 {offsets = [0, 32], sizes = [8, 32], strides = [1, 1]} : vector<8x96xf32> to vector<8x32xf32>
    %291 = vector.extract_strided_slice %280 {offsets = [0, 32], sizes = [8, 32], strides = [1, 1]} : vector<8x96xf32> to vector<8x32xf32>
    %292 = arith.addf %290, %291 : vector<8x32xf32>
    %293 = arith.negf %292 : vector<8x32xf32>
    %294 = math.exp %293 : vector<8x32xf32>
    %cst_79 = arith.constant 1.000000e+00 : f32
    %295 = vector.broadcast %cst_79 : f32 to vector<8x32xf32>
    %296 = arith.addf %295, %294 : vector<8x32xf32>
    %297 = arith.divf %295, %296 : vector<8x32xf32>
    %298 = vector.extract_strided_slice %279 {offsets = [0, 64], sizes = [8, 32], strides = [1, 1]} : vector<8x96xf32> to vector<8x32xf32>
    %299 = vector.extract_strided_slice %280 {offsets = [0, 64], sizes = [8, 32], strides = [1, 1]} : vector<8x96xf32> to vector<8x32xf32>
    %300 = arith.mulf %289, %299 : vector<8x32xf32>
    %301 = arith.addf %298, %300 : vector<8x32xf32>
    %302 = math.tanh %301 : vector<8x32xf32>
    %cst_80 = arith.constant 1.000000e+00 : f32
    %303 = vector.broadcast %cst_80 : f32 to vector<8x32xf32>
    %304 = arith.subf %303, %297 : vector<8x32xf32>
    %305 = arith.mulf %304, %302 : vector<8x32xf32>
    %306 = arith.mulf %297, %281 : vector<8x32xf32>
    %307 = arith.addf %305, %306 : vector<8x32xf32>
    %308 = arith.index_cast %c3_i32 : i32 to index
    %c0_81 = arith.constant 0 : index
    %c0_82 = arith.constant 0 : index
    %309 = vector.load %arg13[%308, %c0_81, %c0_82] : memref<8x8x32xf32, #tpu.memory_space<vmem>>, vector<1x8x32xf32>
    %310 = vector.shape_cast %309 : vector<1x8x32xf32> to vector<8x32xf32>
    %311 = vector.shape_cast %276 : vector<8x32xf32> to vector<1x8x32xf32>
    tpu.vector_store %arg13[%308, %c0_81, %c0_82], %311 {strides = array<i32>} : memref<8x8x32xf32, #tpu.memory_space<vmem>>, vector<1x8x32xf32>,
    %312 = arith.index_cast %243 : i32 to index
    %c0_83 = arith.constant 0 : index
    %c0_84 = arith.constant 0 : index
    %313 = vector.load %arg14[%312, %c0_83, %c0_84] : memref<8x8x32xf32, #tpu.memory_space<vmem>>, vector<1x8x32xf32>
    %314 = vector.shape_cast %313 : vector<1x8x32xf32> to vector<8x32xf32>
    %315 = vector.shape_cast %307 : vector<8x32xf32> to vector<1x8x32xf32>
    tpu.vector_store %arg14[%312, %c0_83, %c0_84], %315 {strides = array<i32>} : memref<8x8x32xf32, #tpu.memory_space<vmem>>, vector<1x8x32xf32>,
    %316 = tpu.concatenate %276, %307 in 1 : vector<8x32xf32>, vector<8x32xf32> -> vector<8x64xf32>
    %c4_i32 = arith.constant 4 : i32
    %c7_i32_85 = arith.constant 7 : i32
    %317 = arith.subi %c7_i32_85, %c4_i32 : i32
    %cst_86 = arith.constant dense<0.000000e+00> : vector<8x192xf32>
    %318 = tpu.matmul %316, %16, %cst_86 {dimension_numbers = #tpu.dot_dimension_numbers<[1], [0], [0], [1], [0, 0, 1, 1], [], []>} : vector<8x64xf32>, vector<64x192xf32>, vector<8x192xf32> -> vector<8x192xf32>
    %319 = arith.addf %318, %19 : vector<8x192xf32>
    %320 = arith.index_cast %c4_i32 : i32 to index
    %c0_87 = arith.constant 0 : index
    %c0_88 = arith.constant 0 : index
    %321 = vector.load %arg11[%320, %c0_87, %c0_88] : memref<8x8x96xf32, #tpu.memory_space<vmem>>, vector<1x8x96xf32>
    %322 = vector.shape_cast %321 : vector<1x8x96xf32> to vector<8x96xf32>
    %323 = vector.extract_strided_slice %319 {offsets = [0, 0], sizes = [8, 96], strides = [1, 1]} : vector<8x192xf32> to vector<8x96xf32>
    %324 = vector.extract_strided_slice %316 {offsets = [0, 0], sizes = [8, 32], strides = [1, 1]} : vector<8x64xf32> to vector<8x32xf32>
    %325 = vector.extract_strided_slice %322 {offsets = [0, 0], sizes = [8, 32], strides = [1, 1]} : vector<8x96xf32> to vector<8x32xf32>
    %326 = vector.extract_strided_slice %323 {offsets = [0, 0], sizes = [8, 32], strides = [1, 1]} : vector<8x96xf32> to vector<8x32xf32>
    %327 = arith.addf %325, %326 : vector<8x32xf32>
    %328 = arith.negf %327 : vector<8x32xf32>
    %329 = math.exp %328 : vector<8x32xf32>
    %cst_89 = arith.constant 1.000000e+00 : f32
    %330 = vector.broadcast %cst_89 : f32 to vector<8x32xf32>
    %331 = arith.addf %330, %329 : vector<8x32xf32>
    %332 = arith.divf %330, %331 : vector<8x32xf32>
    %333 = vector.extract_strided_slice %322 {offsets = [0, 32], sizes = [8, 32], strides = [1, 1]} : vector<8x96xf32> to vector<8x32xf32>
    %334 = vector.extract_strided_slice %323 {offsets = [0, 32], sizes = [8, 32], strides = [1, 1]} : vector<8x96xf32> to vector<8x32xf32>
    %335 = arith.addf %333, %334 : vector<8x32xf32>
    %336 = arith.negf %335 : vector<8x32xf32>
    %337 = math.exp %336 : vector<8x32xf32>
    %cst_90 = arith.constant 1.000000e+00 : f32
    %338 = vector.broadcast %cst_90 : f32 to vector<8x32xf32>
    %339 = arith.addf %338, %337 : vector<8x32xf32>
    %340 = arith.divf %338, %339 : vector<8x32xf32>
    %341 = vector.extract_strided_slice %322 {offsets = [0, 64], sizes = [8, 32], strides = [1, 1]} : vector<8x96xf32> to vector<8x32xf32>
    %342 = vector.extract_strided_slice %323 {offsets = [0, 64], sizes = [8, 32], strides = [1, 1]} : vector<8x96xf32> to vector<8x32xf32>
    %343 = arith.mulf %332, %342 : vector<8x32xf32>
    %344 = arith.addf %341, %343 : vector<8x32xf32>
    %345 = math.tanh %344 : vector<8x32xf32>
    %cst_91 = arith.constant 1.000000e+00 : f32
    %346 = vector.broadcast %cst_91 : f32 to vector<8x32xf32>
    %347 = arith.subf %346, %340 : vector<8x32xf32>
    %348 = arith.mulf %347, %345 : vector<8x32xf32>
    %349 = arith.mulf %340, %324 : vector<8x32xf32>
    %350 = arith.addf %348, %349 : vector<8x32xf32>
    %351 = arith.index_cast %317 : i32 to index
    %c0_92 = arith.constant 0 : index
    %c0_93 = arith.constant 0 : index
    %352 = vector.load %arg12[%351, %c0_92, %c0_93] : memref<8x8x96xf32, #tpu.memory_space<vmem>>, vector<1x8x96xf32>
    %353 = vector.shape_cast %352 : vector<1x8x96xf32> to vector<8x96xf32>
    %354 = vector.extract_strided_slice %319 {offsets = [0, 96], sizes = [8, 96], strides = [1, 1]} : vector<8x192xf32> to vector<8x96xf32>
    %355 = vector.extract_strided_slice %316 {offsets = [0, 32], sizes = [8, 32], strides = [1, 1]} : vector<8x64xf32> to vector<8x32xf32>
    %356 = vector.extract_strided_slice %353 {offsets = [0, 0], sizes = [8, 32], strides = [1, 1]} : vector<8x96xf32> to vector<8x32xf32>
    %357 = vector.extract_strided_slice %354 {offsets = [0, 0], sizes = [8, 32], strides = [1, 1]} : vector<8x96xf32> to vector<8x32xf32>
    %358 = arith.addf %356, %357 : vector<8x32xf32>
    %359 = arith.negf %358 : vector<8x32xf32>
    %360 = math.exp %359 : vector<8x32xf32>
    %cst_94 = arith.constant 1.000000e+00 : f32
    %361 = vector.broadcast %cst_94 : f32 to vector<8x32xf32>
    %362 = arith.addf %361, %360 : vector<8x32xf32>
    %363 = arith.divf %361, %362 : vector<8x32xf32>
    %364 = vector.extract_strided_slice %353 {offsets = [0, 32], sizes = [8, 32], strides = [1, 1]} : vector<8x96xf32> to vector<8x32xf32>
    %365 = vector.extract_strided_slice %354 {offsets = [0, 32], sizes = [8, 32], strides = [1, 1]} : vector<8x96xf32> to vector<8x32xf32>
    %366 = arith.addf %364, %365 : vector<8x32xf32>
    %367 = arith.negf %366 : vector<8x32xf32>
    %368 = math.exp %367 : vector<8x32xf32>
    %cst_95 = arith.constant 1.000000e+00 : f32
    %369 = vector.broadcast %cst_95 : f32 to vector<8x32xf32>
    %370 = arith.addf %369, %368 : vector<8x32xf32>
    %371 = arith.divf %369, %370 : vector<8x32xf32>
    %372 = vector.extract_strided_slice %353 {offsets = [0, 64], sizes = [8, 32], strides = [1, 1]} : vector<8x96xf32> to vector<8x32xf32>
    %373 = vector.extract_strided_slice %354 {offsets = [0, 64], sizes = [8, 32], strides = [1, 1]} : vector<8x96xf32> to vector<8x32xf32>
    %374 = arith.mulf %363, %373 : vector<8x32xf32>
    %375 = arith.addf %372, %374 : vector<8x32xf32>
    %376 = math.tanh %375 : vector<8x32xf32>
    %cst_96 = arith.constant 1.000000e+00 : f32
    %377 = vector.broadcast %cst_96 : f32 to vector<8x32xf32>
    %378 = arith.subf %377, %371 : vector<8x32xf32>
    %379 = arith.mulf %378, %376 : vector<8x32xf32>
    %380 = arith.mulf %371, %355 : vector<8x32xf32>
    %381 = arith.addf %379, %380 : vector<8x32xf32>
    %382 = arith.index_cast %c4_i32 : i32 to index
    %c0_97 = arith.constant 0 : index
    %c0_98 = arith.constant 0 : index
    %383 = vector.load %arg13[%382, %c0_97, %c0_98] : memref<8x8x32xf32, #tpu.memory_space<vmem>>, vector<1x8x32xf32>
    %384 = vector.shape_cast %383 : vector<1x8x32xf32> to vector<8x32xf32>
    %385 = vector.shape_cast %350 : vector<8x32xf32> to vector<1x8x32xf32>
    tpu.vector_store %arg13[%382, %c0_97, %c0_98], %385 {strides = array<i32>} : memref<8x8x32xf32, #tpu.memory_space<vmem>>, vector<1x8x32xf32>,
    %386 = arith.index_cast %317 : i32 to index
    %c0_99 = arith.constant 0 : index
    %c0_100 = arith.constant 0 : index
    %387 = vector.load %arg14[%386, %c0_99, %c0_100] : memref<8x8x32xf32, #tpu.memory_space<vmem>>, vector<1x8x32xf32>
    %388 = vector.shape_cast %387 : vector<1x8x32xf32> to vector<8x32xf32>
    %389 = vector.shape_cast %381 : vector<8x32xf32> to vector<1x8x32xf32>
    tpu.vector_store %arg14[%386, %c0_99, %c0_100], %389 {strides = array<i32>} : memref<8x8x32xf32, #tpu.memory_space<vmem>>, vector<1x8x32xf32>,
    %390 = tpu.concatenate %350, %381 in 1 : vector<8x32xf32>, vector<8x32xf32> -> vector<8x64xf32>
    %c5_i32 = arith.constant 5 : i32
    %c7_i32_101 = arith.constant 7 : i32
    %391 = arith.subi %c7_i32_101, %c5_i32 : i32
    %cst_102 = arith.constant dense<0.000000e+00> : vector<8x192xf32>
    %392 = tpu.matmul %390, %16, %cst_102 {dimension_numbers = #tpu.dot_dimension_numbers<[1], [0], [0], [1], [0, 0, 1, 1], [], []>} : vector<8x64xf32>, vector<64x192xf32>, vector<8x192xf32> -> vector<8x192xf32>
    %393 = arith.addf %392, %19 : vector<8x192xf32>
    %394 = arith.index_cast %c5_i32 : i32 to index
    %c0_103 = arith.constant 0 : index
    %c0_104 = arith.constant 0 : index
    %395 = vector.load %arg11[%394, %c0_103, %c0_104] : memref<8x8x96xf32, #tpu.memory_space<vmem>>, vector<1x8x96xf32>
    %396 = vector.shape_cast %395 : vector<1x8x96xf32> to vector<8x96xf32>
    %397 = vector.extract_strided_slice %393 {offsets = [0, 0], sizes = [8, 96], strides = [1, 1]} : vector<8x192xf32> to vector<8x96xf32>
    %398 = vector.extract_strided_slice %390 {offsets = [0, 0], sizes = [8, 32], strides = [1, 1]} : vector<8x64xf32> to vector<8x32xf32>
    %399 = vector.extract_strided_slice %396 {offsets = [0, 0], sizes = [8, 32], strides = [1, 1]} : vector<8x96xf32> to vector<8x32xf32>
    %400 = vector.extract_strided_slice %397 {offsets = [0, 0], sizes = [8, 32], strides = [1, 1]} : vector<8x96xf32> to vector<8x32xf32>
    %401 = arith.addf %399, %400 : vector<8x32xf32>
    %402 = arith.negf %401 : vector<8x32xf32>
    %403 = math.exp %402 : vector<8x32xf32>
    %cst_105 = arith.constant 1.000000e+00 : f32
    %404 = vector.broadcast %cst_105 : f32 to vector<8x32xf32>
    %405 = arith.addf %404, %403 : vector<8x32xf32>
    %406 = arith.divf %404, %405 : vector<8x32xf32>
    %407 = vector.extract_strided_slice %396 {offsets = [0, 32], sizes = [8, 32], strides = [1, 1]} : vector<8x96xf32> to vector<8x32xf32>
    %408 = vector.extract_strided_slice %397 {offsets = [0, 32], sizes = [8, 32], strides = [1, 1]} : vector<8x96xf32> to vector<8x32xf32>
    %409 = arith.addf %407, %408 : vector<8x32xf32>
    %410 = arith.negf %409 : vector<8x32xf32>
    %411 = math.exp %410 : vector<8x32xf32>
    %cst_106 = arith.constant 1.000000e+00 : f32
    %412 = vector.broadcast %cst_106 : f32 to vector<8x32xf32>
    %413 = arith.addf %412, %411 : vector<8x32xf32>
    %414 = arith.divf %412, %413 : vector<8x32xf32>
    %415 = vector.extract_strided_slice %396 {offsets = [0, 64], sizes = [8, 32], strides = [1, 1]} : vector<8x96xf32> to vector<8x32xf32>
    %416 = vector.extract_strided_slice %397 {offsets = [0, 64], sizes = [8, 32], strides = [1, 1]} : vector<8x96xf32> to vector<8x32xf32>
    %417 = arith.mulf %406, %416 : vector<8x32xf32>
    %418 = arith.addf %415, %417 : vector<8x32xf32>
    %419 = math.tanh %418 : vector<8x32xf32>
    %cst_107 = arith.constant 1.000000e+00 : f32
    %420 = vector.broadcast %cst_107 : f32 to vector<8x32xf32>
    %421 = arith.subf %420, %414 : vector<8x32xf32>
    %422 = arith.mulf %421, %419 : vector<8x32xf32>
    %423 = arith.mulf %414, %398 : vector<8x32xf32>
    %424 = arith.addf %422, %423 : vector<8x32xf32>
    %425 = arith.index_cast %391 : i32 to index
    %c0_108 = arith.constant 0 : index
    %c0_109 = arith.constant 0 : index
    %426 = vector.load %arg12[%425, %c0_108, %c0_109] : memref<8x8x96xf32, #tpu.memory_space<vmem>>, vector<1x8x96xf32>
    %427 = vector.shape_cast %426 : vector<1x8x96xf32> to vector<8x96xf32>
    %428 = vector.extract_strided_slice %393 {offsets = [0, 96], sizes = [8, 96], strides = [1, 1]} : vector<8x192xf32> to vector<8x96xf32>
    %429 = vector.extract_strided_slice %390 {offsets = [0, 32], sizes = [8, 32], strides = [1, 1]} : vector<8x64xf32> to vector<8x32xf32>
    %430 = vector.extract_strided_slice %427 {offsets = [0, 0], sizes = [8, 32], strides = [1, 1]} : vector<8x96xf32> to vector<8x32xf32>
    %431 = vector.extract_strided_slice %428 {offsets = [0, 0], sizes = [8, 32], strides = [1, 1]} : vector<8x96xf32> to vector<8x32xf32>
    %432 = arith.addf %430, %431 : vector<8x32xf32>
    %433 = arith.negf %432 : vector<8x32xf32>
    %434 = math.exp %433 : vector<8x32xf32>
    %cst_110 = arith.constant 1.000000e+00 : f32
    %435 = vector.broadcast %cst_110 : f32 to vector<8x32xf32>
    %436 = arith.addf %435, %434 : vector<8x32xf32>
    %437 = arith.divf %435, %436 : vector<8x32xf32>
    %438 = vector.extract_strided_slice %427 {offsets = [0, 32], sizes = [8, 32], strides = [1, 1]} : vector<8x96xf32> to vector<8x32xf32>
    %439 = vector.extract_strided_slice %428 {offsets = [0, 32], sizes = [8, 32], strides = [1, 1]} : vector<8x96xf32> to vector<8x32xf32>
    %440 = arith.addf %438, %439 : vector<8x32xf32>
    %441 = arith.negf %440 : vector<8x32xf32>
    %442 = math.exp %441 : vector<8x32xf32>
    %cst_111 = arith.constant 1.000000e+00 : f32
    %443 = vector.broadcast %cst_111 : f32 to vector<8x32xf32>
    %444 = arith.addf %443, %442 : vector<8x32xf32>
    %445 = arith.divf %443, %444 : vector<8x32xf32>
    %446 = vector.extract_strided_slice %427 {offsets = [0, 64], sizes = [8, 32], strides = [1, 1]} : vector<8x96xf32> to vector<8x32xf32>
    %447 = vector.extract_strided_slice %428 {offsets = [0, 64], sizes = [8, 32], strides = [1, 1]} : vector<8x96xf32> to vector<8x32xf32>
    %448 = arith.mulf %437, %447 : vector<8x32xf32>
    %449 = arith.addf %446, %448 : vector<8x32xf32>
    %450 = math.tanh %449 : vector<8x32xf32>
    %cst_112 = arith.constant 1.000000e+00 : f32
    %451 = vector.broadcast %cst_112 : f32 to vector<8x32xf32>
    %452 = arith.subf %451, %445 : vector<8x32xf32>
    %453 = arith.mulf %452, %450 : vector<8x32xf32>
    %454 = arith.mulf %445, %429 : vector<8x32xf32>
    %455 = arith.addf %453, %454 : vector<8x32xf32>
    %456 = arith.index_cast %c5_i32 : i32 to index
    %c0_113 = arith.constant 0 : index
    %c0_114 = arith.constant 0 : index
    %457 = vector.load %arg13[%456, %c0_113, %c0_114] : memref<8x8x32xf32, #tpu.memory_space<vmem>>, vector<1x8x32xf32>
    %458 = vector.shape_cast %457 : vector<1x8x32xf32> to vector<8x32xf32>
    %459 = vector.shape_cast %424 : vector<8x32xf32> to vector<1x8x32xf32>
    tpu.vector_store %arg13[%456, %c0_113, %c0_114], %459 {strides = array<i32>} : memref<8x8x32xf32, #tpu.memory_space<vmem>>, vector<1x8x32xf32>,
    %460 = arith.index_cast %391 : i32 to index
    %c0_115 = arith.constant 0 : index
    %c0_116 = arith.constant 0 : index
    %461 = vector.load %arg14[%460, %c0_115, %c0_116] : memref<8x8x32xf32, #tpu.memory_space<vmem>>, vector<1x8x32xf32>
    %462 = vector.shape_cast %461 : vector<1x8x32xf32> to vector<8x32xf32>
    %463 = vector.shape_cast %455 : vector<8x32xf32> to vector<1x8x32xf32>
    tpu.vector_store %arg14[%460, %c0_115, %c0_116], %463 {strides = array<i32>} : memref<8x8x32xf32, #tpu.memory_space<vmem>>, vector<1x8x32xf32>,
    %464 = tpu.concatenate %424, %455 in 1 : vector<8x32xf32>, vector<8x32xf32> -> vector<8x64xf32>
    %c6_i32 = arith.constant 6 : i32
    %c7_i32_117 = arith.constant 7 : i32
    %465 = arith.subi %c7_i32_117, %c6_i32 : i32
    %cst_118 = arith.constant dense<0.000000e+00> : vector<8x192xf32>
    %466 = tpu.matmul %464, %16, %cst_118 {dimension_numbers = #tpu.dot_dimension_numbers<[1], [0], [0], [1], [0, 0, 1, 1], [], []>} : vector<8x64xf32>, vector<64x192xf32>, vector<8x192xf32> -> vector<8x192xf32>
    %467 = arith.addf %466, %19 : vector<8x192xf32>
    %468 = arith.index_cast %c6_i32 : i32 to index
    %c0_119 = arith.constant 0 : index
    %c0_120 = arith.constant 0 : index
    %469 = vector.load %arg11[%468, %c0_119, %c0_120] : memref<8x8x96xf32, #tpu.memory_space<vmem>>, vector<1x8x96xf32>
    %470 = vector.shape_cast %469 : vector<1x8x96xf32> to vector<8x96xf32>
    %471 = vector.extract_strided_slice %467 {offsets = [0, 0], sizes = [8, 96], strides = [1, 1]} : vector<8x192xf32> to vector<8x96xf32>
    %472 = vector.extract_strided_slice %464 {offsets = [0, 0], sizes = [8, 32], strides = [1, 1]} : vector<8x64xf32> to vector<8x32xf32>
    %473 = vector.extract_strided_slice %470 {offsets = [0, 0], sizes = [8, 32], strides = [1, 1]} : vector<8x96xf32> to vector<8x32xf32>
    %474 = vector.extract_strided_slice %471 {offsets = [0, 0], sizes = [8, 32], strides = [1, 1]} : vector<8x96xf32> to vector<8x32xf32>
    %475 = arith.addf %473, %474 : vector<8x32xf32>
    %476 = arith.negf %475 : vector<8x32xf32>
    %477 = math.exp %476 : vector<8x32xf32>
    %cst_121 = arith.constant 1.000000e+00 : f32
    %478 = vector.broadcast %cst_121 : f32 to vector<8x32xf32>
    %479 = arith.addf %478, %477 : vector<8x32xf32>
    %480 = arith.divf %478, %479 : vector<8x32xf32>
    %481 = vector.extract_strided_slice %470 {offsets = [0, 32], sizes = [8, 32], strides = [1, 1]} : vector<8x96xf32> to vector<8x32xf32>
    %482 = vector.extract_strided_slice %471 {offsets = [0, 32], sizes = [8, 32], strides = [1, 1]} : vector<8x96xf32> to vector<8x32xf32>
    %483 = arith.addf %481, %482 : vector<8x32xf32>
    %484 = arith.negf %483 : vector<8x32xf32>
    %485 = math.exp %484 : vector<8x32xf32>
    %cst_122 = arith.constant 1.000000e+00 : f32
    %486 = vector.broadcast %cst_122 : f32 to vector<8x32xf32>
    %487 = arith.addf %486, %485 : vector<8x32xf32>
    %488 = arith.divf %486, %487 : vector<8x32xf32>
    %489 = vector.extract_strided_slice %470 {offsets = [0, 64], sizes = [8, 32], strides = [1, 1]} : vector<8x96xf32> to vector<8x32xf32>
    %490 = vector.extract_strided_slice %471 {offsets = [0, 64], sizes = [8, 32], strides = [1, 1]} : vector<8x96xf32> to vector<8x32xf32>
    %491 = arith.mulf %480, %490 : vector<8x32xf32>
    %492 = arith.addf %489, %491 : vector<8x32xf32>
    %493 = math.tanh %492 : vector<8x32xf32>
    %cst_123 = arith.constant 1.000000e+00 : f32
    %494 = vector.broadcast %cst_123 : f32 to vector<8x32xf32>
    %495 = arith.subf %494, %488 : vector<8x32xf32>
    %496 = arith.mulf %495, %493 : vector<8x32xf32>
    %497 = arith.mulf %488, %472 : vector<8x32xf32>
    %498 = arith.addf %496, %497 : vector<8x32xf32>
    %499 = arith.index_cast %465 : i32 to index
    %c0_124 = arith.constant 0 : index
    %c0_125 = arith.constant 0 : index
    %500 = vector.load %arg12[%499, %c0_124, %c0_125] : memref<8x8x96xf32, #tpu.memory_space<vmem>>, vector<1x8x96xf32>
    %501 = vector.shape_cast %500 : vector<1x8x96xf32> to vector<8x96xf32>
    %502 = vector.extract_strided_slice %467 {offsets = [0, 96], sizes = [8, 96], strides = [1, 1]} : vector<8x192xf32> to vector<8x96xf32>
    %503 = vector.extract_strided_slice %464 {offsets = [0, 32], sizes = [8, 32], strides = [1, 1]} : vector<8x64xf32> to vector<8x32xf32>
    %504 = vector.extract_strided_slice %501 {offsets = [0, 0], sizes = [8, 32], strides = [1, 1]} : vector<8x96xf32> to vector<8x32xf32>
    %505 = vector.extract_strided_slice %502 {offsets = [0, 0], sizes = [8, 32], strides = [1, 1]} : vector<8x96xf32> to vector<8x32xf32>
    %506 = arith.addf %504, %505 : vector<8x32xf32>
    %507 = arith.negf %506 : vector<8x32xf32>
    %508 = math.exp %507 : vector<8x32xf32>
    %cst_126 = arith.constant 1.000000e+00 : f32
    %509 = vector.broadcast %cst_126 : f32 to vector<8x32xf32>
    %510 = arith.addf %509, %508 : vector<8x32xf32>
    %511 = arith.divf %509, %510 : vector<8x32xf32>
    %512 = vector.extract_strided_slice %501 {offsets = [0, 32], sizes = [8, 32], strides = [1, 1]} : vector<8x96xf32> to vector<8x32xf32>
    %513 = vector.extract_strided_slice %502 {offsets = [0, 32], sizes = [8, 32], strides = [1, 1]} : vector<8x96xf32> to vector<8x32xf32>
    %514 = arith.addf %512, %513 : vector<8x32xf32>
    %515 = arith.negf %514 : vector<8x32xf32>
    %516 = math.exp %515 : vector<8x32xf32>
    %cst_127 = arith.constant 1.000000e+00 : f32
    %517 = vector.broadcast %cst_127 : f32 to vector<8x32xf32>
    %518 = arith.addf %517, %516 : vector<8x32xf32>
    %519 = arith.divf %517, %518 : vector<8x32xf32>
    %520 = vector.extract_strided_slice %501 {offsets = [0, 64], sizes = [8, 32], strides = [1, 1]} : vector<8x96xf32> to vector<8x32xf32>
    %521 = vector.extract_strided_slice %502 {offsets = [0, 64], sizes = [8, 32], strides = [1, 1]} : vector<8x96xf32> to vector<8x32xf32>
    %522 = arith.mulf %511, %521 : vector<8x32xf32>
    %523 = arith.addf %520, %522 : vector<8x32xf32>
    %524 = math.tanh %523 : vector<8x32xf32>
    %cst_128 = arith.constant 1.000000e+00 : f32
    %525 = vector.broadcast %cst_128 : f32 to vector<8x32xf32>
    %526 = arith.subf %525, %519 : vector<8x32xf32>
    %527 = arith.mulf %526, %524 : vector<8x32xf32>
    %528 = arith.mulf %519, %503 : vector<8x32xf32>
    %529 = arith.addf %527, %528 : vector<8x32xf32>
    %530 = arith.index_cast %c6_i32 : i32 to index
    %c0_129 = arith.constant 0 : index
    %c0_130 = arith.constant 0 : index
    %531 = vector.load %arg13[%530, %c0_129, %c0_130] : memref<8x8x32xf32, #tpu.memory_space<vmem>>, vector<1x8x32xf32>
    %532 = vector.shape_cast %531 : vector<1x8x32xf32> to vector<8x32xf32>
    %533 = vector.shape_cast %498 : vector<8x32xf32> to vector<1x8x32xf32>
    tpu.vector_store %arg13[%530, %c0_129, %c0_130], %533 {strides = array<i32>} : memref<8x8x32xf32, #tpu.memory_space<vmem>>, vector<1x8x32xf32>,
    %534 = arith.index_cast %465 : i32 to index
    %c0_131 = arith.constant 0 : index
    %c0_132 = arith.constant 0 : index
    %535 = vector.load %arg14[%534, %c0_131, %c0_132] : memref<8x8x32xf32, #tpu.memory_space<vmem>>, vector<1x8x32xf32>
    %536 = vector.shape_cast %535 : vector<1x8x32xf32> to vector<8x32xf32>
    %537 = vector.shape_cast %529 : vector<8x32xf32> to vector<1x8x32xf32>
    tpu.vector_store %arg14[%534, %c0_131, %c0_132], %537 {strides = array<i32>} : memref<8x8x32xf32, #tpu.memory_space<vmem>>, vector<1x8x32xf32>,
    %538 = tpu.concatenate %498, %529 in 1 : vector<8x32xf32>, vector<8x32xf32> -> vector<8x64xf32>
    %c7_i32_133 = arith.constant 7 : i32
    %c7_i32_134 = arith.constant 7 : i32
    %539 = arith.subi %c7_i32_134, %c7_i32_133 : i32
    %cst_135 = arith.constant dense<0.000000e+00> : vector<8x192xf32>
    %540 = tpu.matmul %538, %16, %cst_135 {dimension_numbers = #tpu.dot_dimension_numbers<[1], [0], [0], [1], [0, 0, 1, 1], [], []>} : vector<8x64xf32>, vector<64x192xf32>, vector<8x192xf32> -> vector<8x192xf32>
    %541 = arith.addf %540, %19 : vector<8x192xf32>
    %542 = arith.index_cast %c7_i32_133 : i32 to index
    %c0_136 = arith.constant 0 : index
    %c0_137 = arith.constant 0 : index
    %543 = vector.load %arg11[%542, %c0_136, %c0_137] : memref<8x8x96xf32, #tpu.memory_space<vmem>>, vector<1x8x96xf32>
    %544 = vector.shape_cast %543 : vector<1x8x96xf32> to vector<8x96xf32>
    %545 = vector.extract_strided_slice %541 {offsets = [0, 0], sizes = [8, 96], strides = [1, 1]} : vector<8x192xf32> to vector<8x96xf32>
    %546 = vector.extract_strided_slice %538 {offsets = [0, 0], sizes = [8, 32], strides = [1, 1]} : vector<8x64xf32> to vector<8x32xf32>
    %547 = vector.extract_strided_slice %544 {offsets = [0, 0], sizes = [8, 32], strides = [1, 1]} : vector<8x96xf32> to vector<8x32xf32>
    %548 = vector.extract_strided_slice %545 {offsets = [0, 0], sizes = [8, 32], strides = [1, 1]} : vector<8x96xf32> to vector<8x32xf32>
    %549 = arith.addf %547, %548 : vector<8x32xf32>
    %550 = arith.negf %549 : vector<8x32xf32>
    %551 = math.exp %550 : vector<8x32xf32>
    %cst_138 = arith.constant 1.000000e+00 : f32
    %552 = vector.broadcast %cst_138 : f32 to vector<8x32xf32>
    %553 = arith.addf %552, %551 : vector<8x32xf32>
    %554 = arith.divf %552, %553 : vector<8x32xf32>
    %555 = vector.extract_strided_slice %544 {offsets = [0, 32], sizes = [8, 32], strides = [1, 1]} : vector<8x96xf32> to vector<8x32xf32>
    %556 = vector.extract_strided_slice %545 {offsets = [0, 32], sizes = [8, 32], strides = [1, 1]} : vector<8x96xf32> to vector<8x32xf32>
    %557 = arith.addf %555, %556 : vector<8x32xf32>
    %558 = arith.negf %557 : vector<8x32xf32>
    %559 = math.exp %558 : vector<8x32xf32>
    %cst_139 = arith.constant 1.000000e+00 : f32
    %560 = vector.broadcast %cst_139 : f32 to vector<8x32xf32>
    %561 = arith.addf %560, %559 : vector<8x32xf32>
    %562 = arith.divf %560, %561 : vector<8x32xf32>
    %563 = vector.extract_strided_slice %544 {offsets = [0, 64], sizes = [8, 32], strides = [1, 1]} : vector<8x96xf32> to vector<8x32xf32>
    %564 = vector.extract_strided_slice %545 {offsets = [0, 64], sizes = [8, 32], strides = [1, 1]} : vector<8x96xf32> to vector<8x32xf32>
    %565 = arith.mulf %554, %564 : vector<8x32xf32>
    %566 = arith.addf %563, %565 : vector<8x32xf32>
    %567 = math.tanh %566 : vector<8x32xf32>
    %cst_140 = arith.constant 1.000000e+00 : f32
    %568 = vector.broadcast %cst_140 : f32 to vector<8x32xf32>
    %569 = arith.subf %568, %562 : vector<8x32xf32>
    %570 = arith.mulf %569, %567 : vector<8x32xf32>
    %571 = arith.mulf %562, %546 : vector<8x32xf32>
    %572 = arith.addf %570, %571 : vector<8x32xf32>
    %573 = arith.index_cast %539 : i32 to index
    %c0_141 = arith.constant 0 : index
    %c0_142 = arith.constant 0 : index
    %574 = vector.load %arg12[%573, %c0_141, %c0_142] : memref<8x8x96xf32, #tpu.memory_space<vmem>>, vector<1x8x96xf32>
    %575 = vector.shape_cast %574 : vector<1x8x96xf32> to vector<8x96xf32>
    %576 = vector.extract_strided_slice %541 {offsets = [0, 96], sizes = [8, 96], strides = [1, 1]} : vector<8x192xf32> to vector<8x96xf32>
    %577 = vector.extract_strided_slice %538 {offsets = [0, 32], sizes = [8, 32], strides = [1, 1]} : vector<8x64xf32> to vector<8x32xf32>
    %578 = vector.extract_strided_slice %575 {offsets = [0, 0], sizes = [8, 32], strides = [1, 1]} : vector<8x96xf32> to vector<8x32xf32>
    %579 = vector.extract_strided_slice %576 {offsets = [0, 0], sizes = [8, 32], strides = [1, 1]} : vector<8x96xf32> to vector<8x32xf32>
    %580 = arith.addf %578, %579 : vector<8x32xf32>
    %581 = arith.negf %580 : vector<8x32xf32>
    %582 = math.exp %581 : vector<8x32xf32>
    %cst_143 = arith.constant 1.000000e+00 : f32
    %583 = vector.broadcast %cst_143 : f32 to vector<8x32xf32>
    %584 = arith.addf %583, %582 : vector<8x32xf32>
    %585 = arith.divf %583, %584 : vector<8x32xf32>
    %586 = vector.extract_strided_slice %575 {offsets = [0, 32], sizes = [8, 32], strides = [1, 1]} : vector<8x96xf32> to vector<8x32xf32>
    %587 = vector.extract_strided_slice %576 {offsets = [0, 32], sizes = [8, 32], strides = [1, 1]} : vector<8x96xf32> to vector<8x32xf32>
    %588 = arith.addf %586, %587 : vector<8x32xf32>
    %589 = arith.negf %588 : vector<8x32xf32>
    %590 = math.exp %589 : vector<8x32xf32>
    %cst_144 = arith.constant 1.000000e+00 : f32
    %591 = vector.broadcast %cst_144 : f32 to vector<8x32xf32>
    %592 = arith.addf %591, %590 : vector<8x32xf32>
    %593 = arith.divf %591, %592 : vector<8x32xf32>
    %594 = vector.extract_strided_slice %575 {offsets = [0, 64], sizes = [8, 32], strides = [1, 1]} : vector<8x96xf32> to vector<8x32xf32>
    %595 = vector.extract_strided_slice %576 {offsets = [0, 64], sizes = [8, 32], strides = [1, 1]} : vector<8x96xf32> to vector<8x32xf32>
    %596 = arith.mulf %585, %595 : vector<8x32xf32>
    %597 = arith.addf %594, %596 : vector<8x32xf32>
    %598 = math.tanh %597 : vector<8x32xf32>
    %cst_145 = arith.constant 1.000000e+00 : f32
    %599 = vector.broadcast %cst_145 : f32 to vector<8x32xf32>
    %600 = arith.subf %599, %593 : vector<8x32xf32>
    %601 = arith.mulf %600, %598 : vector<8x32xf32>
    %602 = arith.mulf %593, %577 : vector<8x32xf32>
    %603 = arith.addf %601, %602 : vector<8x32xf32>
    %604 = arith.index_cast %c7_i32_133 : i32 to index
    %c0_146 = arith.constant 0 : index
    %c0_147 = arith.constant 0 : index
    %605 = vector.load %arg13[%604, %c0_146, %c0_147] : memref<8x8x32xf32, #tpu.memory_space<vmem>>, vector<1x8x32xf32>
    %606 = vector.shape_cast %605 : vector<1x8x32xf32> to vector<8x32xf32>
    %607 = vector.shape_cast %572 : vector<8x32xf32> to vector<1x8x32xf32>
    tpu.vector_store %arg13[%604, %c0_146, %c0_147], %607 {strides = array<i32>} : memref<8x8x32xf32, #tpu.memory_space<vmem>>, vector<1x8x32xf32>,
    %608 = arith.index_cast %539 : i32 to index
    %c0_148 = arith.constant 0 : index
    %c0_149 = arith.constant 0 : index
    %609 = vector.load %arg14[%608, %c0_148, %c0_149] : memref<8x8x32xf32, #tpu.memory_space<vmem>>, vector<1x8x32xf32>
    %610 = vector.shape_cast %609 : vector<1x8x32xf32> to vector<8x32xf32>
    %611 = vector.shape_cast %603 : vector<8x32xf32> to vector<1x8x32xf32>
    tpu.vector_store %arg14[%608, %c0_148, %c0_149], %611 {strides = array<i32>} : memref<8x8x32xf32, #tpu.memory_space<vmem>>, vector<1x8x32xf32>,
    %612 = tpu.concatenate %572, %603 in 1 : vector<8x32xf32>, vector<8x32xf32> -> vector<8x64xf32>
    %c8_i32 = arith.constant 8 : i32
    %c0_150 = arith.constant 0 : index
    %c0_151 = arith.constant 0 : index
    %613 = vector.load %arg8[%c0_150, %c0_151] : memref<64x128xf32, #tpu.memory_space<vmem>>, vector<64x128xf32>
    %c0_152 = arith.constant 0 : index
    %c0_153 = arith.constant 0 : index
    %c0_154 = arith.constant 0 : index
    %614 = vector.load %arg13[%c0_152, %c0_153, %c0_154] : memref<8x8x32xf32, #tpu.memory_space<vmem>>, vector<8x8x32xf32>
    %615 = vector.shape_cast %614 : vector<8x8x32xf32> to vector<64x32xf32>
    %c0_155 = arith.constant 0 : index
    %c0_156 = arith.constant 0 : index
    %c0_157 = arith.constant 0 : index
    %616 = vector.load %arg14[%c0_155, %c0_156, %c0_157] : memref<8x8x32xf32, #tpu.memory_space<vmem>>, vector<8x8x32xf32>
    %617 = vector.shape_cast %616 : vector<8x8x32xf32> to vector<64x32xf32>
    %618 = vector.extract_strided_slice %613 {offsets = [0, 0], sizes = [32, 128], strides = [1, 1]} : vector<64x128xf32> to vector<32x128xf32>
    %cst_158 = arith.constant dense<0.000000e+00> : vector<64x128xf32>
    %619 = tpu.matmul %615, %618, %cst_158 {dimension_numbers = #tpu.dot_dimension_numbers<[1], [0], [0], [1], [0, 0, 1, 1], [], []>} : vector<64x32xf32>, vector<32x128xf32>, vector<64x128xf32> -> vector<64x128xf32>
    %620 = vector.extract_strided_slice %613 {offsets = [32, 0], sizes = [32, 128], strides = [1, 1]} : vector<64x128xf32> to vector<32x128xf32>
    %cst_159 = arith.constant dense<0.000000e+00> : vector<64x128xf32>
    %621 = tpu.matmul %617, %620, %cst_159 {dimension_numbers = #tpu.dot_dimension_numbers<[1], [0], [0], [1], [0, 0, 1, 1], [], []>} : vector<64x32xf32>, vector<32x128xf32>, vector<64x128xf32> -> vector<64x128xf32>
    %622 = arith.addf %619, %621 : vector<64x128xf32>
    %c0_160 = arith.constant 0 : index
    %c0_161 = arith.constant 0 : index
    %623 = vector.load %arg9[%c0_160, %c0_161] : memref<1x128xf32, #tpu.memory_space<vmem>>, vector<1x128xf32>
    %624 = vector.broadcast %623 : vector<1x128xf32> to vector<64x128xf32>
    %625 = arith.addf %622, %624 : vector<64x128xf32>
    %626 = vector.shape_cast %625 : vector<64x128xf32> to vector<8x8x128xf32>
    %c0_162 = arith.constant 0 : index
    %c0_163 = arith.constant 0 : index
    %c0_164 = arith.constant 0 : index
    %627 = vector.load %arg10[%c0_162, %c0_163, %c0_164] : memref<8x8x128xf32, #tpu.memory_space<vmem>>, vector<8x8x128xf32>
    tpu.vector_store %arg10[%c0_162, %c0_163, %c0_164], %626 {strides = array<i32>} : memref<8x8x128xf32, #tpu.memory_space<vmem>>, vector<8x8x128xf32>,
    return
  }
  func.func @transform_0(%arg0: i32) -> (i32, i32, i32) {
    %c0_i32 = arith.constant 0 : i32
    %c0_i32_0 = arith.constant 0 : i32
    %c0_i32_1 = arith.constant 0 : i32
    return %c0_i32, %arg0, %c0_i32_0 : i32, i32, i32
  }
  func.func @transform_1(%arg0: i32) -> (i32, i32) {
    %c0_i32 = arith.constant 0 : i32
    %c0_i32_0 = arith.constant 0 : i32
    %c0_i32_1 = arith.constant 0 : i32
    return %c0_i32, %c0_i32_0 : i32, i32
  }
  func.func @transform_2(%arg0: i32) -> (i32, i32) {
    %c0_i32 = arith.constant 0 : i32
    %c0_i32_0 = arith.constant 0 : i32
    %c0_i32_1 = arith.constant 0 : i32
    return %c0_i32, %c0_i32_0 : i32, i32
  }
  func.func @transform_3(%arg0: i32) -> (i32, i32) {
    %c0_i32 = arith.constant 0 : i32
    %c0_i32_0 = arith.constant 0 : i32
    %c0_i32_1 = arith.constant 0 : i32
    return %c0_i32, %c0_i32_0 : i32, i32
  }
  func.func @transform_4(%arg0: i32) -> (i32, i32) {
    %c0_i32 = arith.constant 0 : i32
    %c0_i32_0 = arith.constant 0 : i32
    %c0_i32_1 = arith.constant 0 : i32
    return %c0_i32, %c0_i32_0 : i32, i32
  }
  func.func @transform_5(%arg0: i32) -> (i32, i32) {
    %c0_i32 = arith.constant 0 : i32
    %c0_i32_0 = arith.constant 0 : i32
    %c0_i32_1 = arith.constant 0 : i32
    return %c0_i32, %c0_i32_0 : i32, i32
  }
  func.func @transform_6(%arg0: i32) -> (i32, i32) {
    %c0_i32 = arith.constant 0 : i32
    %c0_i32_0 = arith.constant 0 : i32
    %c0_i32_1 = arith.constant 0 : i32
    return %c0_i32, %c0_i32_0 : i32, i32
  }
  func.func @transform_7(%arg0: i32) -> (i32, i32) {
    %c0_i32 = arith.constant 0 : i32
    %c0_i32_0 = arith.constant 0 : i32
    %c0_i32_1 = arith.constant 0 : i32
    return %c0_i32, %c0_i32_0 : i32, i32
  }
  func.func @transform_8(%arg0: i32) -> (i32, i32) {
    %c0_i32 = arith.constant 0 : i32
    %c0_i32_0 = arith.constant 0 : i32
    %c0_i32_1 = arith.constant 0 : i32
    return %c0_i32, %c0_i32_0 : i32, i32
  }
  func.func @transform_9(%arg0: i32) -> (i32, i32, i32) {
    %c0_i32 = arith.constant 0 : i32
    %c0_i32_0 = arith.constant 0 : i32
    %c0_i32_1 = arith.constant 0 : i32
    return %c0_i32, %arg0, %c0_i32_0 : i32, i32, i32
  }
}

</mosaic_0001>

<llo_original>
// kernel: batch_rnn_forward.1
$region0: #{batch_rnn_forward.1}
  #allocation0 [shape = 'u32[]', space=smem, size = 0x4, offset = 0x4, fixed_abs, tag = 'smem constant byte address 0x4 - core index']
  #allocation1 [shape = 'u32[144,128]{1,0:T(1,128)}', space=vmem, size = 0x12000, scoped, tag = 'internal scratch']
  #allocation2 [shape = 'f32[8,8,96]{2,1,0:T(8,128)}', space=vmem, size = 0x8000, scoped, tag = 'scratch operand']
  #allocation3 [shape = 'f32[8,8,96]{2,1,0:T(8,128)}', space=vmem, size = 0x8000, scoped, tag = 'scratch operand']
  #allocation4 [shape = 'f32[8,8,32]{2,1,0:T(8,128)}', space=vmem, size = 0x8000, scoped, tag = 'scratch operand']
  #allocation5 [shape = 'f32[8,8,32]{2,1,0:T(8,128)}', space=vmem, size = 0x8000, scoped, tag = 'scratch operand']
  %s0 = inlined_call_operand.vmem [shape: f32[8,8,16], index: 0, kind: input, shape index: {}]
  %s1 = inlined_call_operand.vmem [shape: f32[16,96], index: 1, kind: input, shape index: {}]
  %s2 = inlined_call_operand.vmem [shape: f32[1,96], index: 2, kind: input, shape index: {}]
  %s3 = inlined_call_operand.vmem [shape: f32[16,96], index: 3, kind: input, shape index: {}]
  %s4 = inlined_call_operand.vmem [shape: f32[1,96], index: 4, kind: input, shape index: {}]
  %s5 = inlined_call_operand.vmem [shape: f32[64,192], index: 5, kind: input, shape index: {}]
  %s6 = inlined_call_operand.vmem [shape: f32[1,192], index: 6, kind: input, shape index: {}]
  %s7 = inlined_call_operand.vmem [shape: f32[64,128], index: 7, kind: input, shape index: {}]
  %s8 = inlined_call_operand.vmem [shape: f32[1,128], index: 8, kind: input, shape index: {}]
  %s9 = inlined_call_operand.vmem [shape: f32[8,8,128], index: 9, kind: output, shape index: {}]
  %s10 = sld [smem:[#allocation0]]
  $region46: #{batch_rnn_forward.1} parent=0
    _
  %s12 = ssub.s32 1, %s10
  %s13 = scalar_select 0, %s12, %s10
  // Predicated region
  $region2: #{batch_rnn_forward.1} parent=0 // pred_check
    _
  $region3: #{batch_rnn_forward.1} parent=0 // pred_check_branch
    %15 = sbr.rel (0) target = $region5
  $region4: #{batch_rnn_forward.1} parent=0 // pred_region
    _
  $region5: #{batch_rnn_forward.1} parent=0 // pred_fallthru
    _
  // Predicated region
  $region6: #{batch_rnn_forward.1} parent=0 // pred_check
    _
  $region7: #{batch_rnn_forward.1} parent=0 // pred_check_branch
    %17 = sbr.rel (0) target = $region9
  $region8: #{batch_rnn_forward.1} parent=0 // pred_region
    _
  $region9: #{batch_rnn_forward.1} parent=0 // pred_fallthru
    _
  // Predicated region
  $region10: #{batch_rnn_forward.1} parent=0 // pred_check
    _
  $region11: #{batch_rnn_forward.1} parent=0 // pred_check_branch
    %19 = sbr.rel (0) target = $region13
  $region12: #{batch_rnn_forward.1} parent=0 // pred_region
    _
  $region13: #{batch_rnn_forward.1} parent=0 // pred_fallthru
    _
  // Predicated region
  $region14: #{batch_rnn_forward.1} parent=0 // pred_check
    _
  $region15: #{batch_rnn_forward.1} parent=0 // pred_check_branch
    %21 = sbr.rel (0) target = $region17
  $region16: #{batch_rnn_forward.1} parent=0 // pred_region
    _
  $region17: #{batch_rnn_forward.1} parent=0 // pred_fallthru
    _
  // Predicated region
  $region18: #{batch_rnn_forward.1} parent=0 // pred_check
    _
  $region19: #{batch_rnn_forward.1} parent=0 // pred_check_branch
    %23 = sbr.rel (0) target = $region21
  $region20: #{batch_rnn_forward.1} parent=0 // pred_region
    _
  $region21: #{batch_rnn_forward.1} parent=0 // pred_fallthru
    _
  // Predicated region
  $region22: #{batch_rnn_forward.1} parent=0 // pred_check
    _
  $region23: #{batch_rnn_forward.1} parent=0 // pred_check_branch
    %25 = sbr.rel (0) target = $region25
  $region24: #{batch_rnn_forward.1} parent=0 // pred_region
    _
  $region25: #{batch_rnn_forward.1} parent=0 // pred_fallthru
    _
  // Predicated region
  $region26: #{batch_rnn_forward.1} parent=0 // pred_check
    _
  $region27: #{batch_rnn_forward.1} parent=0 // pred_check_branch
    %27 = sbr.rel (0) target = $region29
  $region28: #{batch_rnn_forward.1} parent=0 // pred_region
    _
  $region29: #{batch_rnn_forward.1} parent=0 // pred_fallthru
    _
  // Predicated region
  $region30: #{batch_rnn_forward.1} parent=0 // pred_check
    _
  $region31: #{batch_rnn_forward.1} parent=0 // pred_check_branch
    %29 = sbr.rel (0) target = $region33
  $region32: #{batch_rnn_forward.1} parent=0 // pred_region
    _
  $region33: #{batch_rnn_forward.1} parent=0 // pred_fallthru
    _
  // Predicated region
  $region34: #{batch_rnn_forward.1} parent=0 // pred_check
    _
  $region35: #{batch_rnn_forward.1} parent=0 // pred_check_branch
    %31 = sbr.rel (0) target = $region37
  $region36: #{batch_rnn_forward.1} parent=0 // pred_region
    _
  $region37: #{batch_rnn_forward.1} parent=0 // pred_fallthru
    _
  %v32 = vld [vmem:[%s0] sm:$0xff]
  %v33 = vld [vmem:[%s0 + $0x8] sm:$0xff]
  %v34 = vld [vmem:[%s0 + $0x10] sm:$0xff]
  %v35 = vld [vmem:[%s0 + $0x18] sm:$0xff]
  %v36 = vld [vmem:[%s0 + $0x20] sm:$0xff]
  %v37 = vld [vmem:[%s0 + $0x28] sm:$0xff]
  %v38 = vld [vmem:[%s0 + $0x30] sm:$0xff]
  %v39 = vld [vmem:[%s0 + $0x38] sm:$0xff]
  %v40 = vld [vmem:[%s1] sm:$0xff]
  %v41 = vld [vmem:[%s1 + $0x8] sm:$0xff]
  %v42 = vld [vmem:[%s2] sm:$0x1]
  %v44 = vlaneseq
  %v45 = vshrl.u32 %v44, 7
  %v46 = vsub.s32 0, %v45
  %v47 = vrot.slane %v42, %v46
  %vm49 = vcmask 130048
  %v51 = vsel %vm49, %v32, 0
  %v54 = vsel %vm49, %v33, 0
  %v57 = vsel %vm49, %v34, 0
  %v60 = vsel %vm49, %v35, 0
  %v63 = vsel %vm49, %v36, 0
  %v66 = vsel %vm49, %v37, 0
  %v69 = vsel %vm49, %v38, 0
  %v72 = vsel %vm49, %v39, 0
  %74 = vmatprep.subr.mxu0 0.0
  %75 = vmatpush1.msra.mxu0 %v40
  %76 = vmatprep.subr.mxu0 0.0
  %77 = vmatpush1.msra.mxu0 %v41
  %78 = vmatprep.subr.mxu0 0.0
  %79 = vmatpush1.msra.mxu0 0.0
  %80 = vmatprep.subr.mxu0 0.0
  %81 = vmatpush1.msra.mxu0 0.0
  %82 = vmatprep.subr.mxu0 0.0
  %83 = vmatpush1.msra.mxu0 0.0
  %84 = vmatprep.subr.mxu0 0.0
  %85 = vmatpush1.msra.mxu0 0.0
  %86 = vmatprep.subr.mxu0 0.0
  %87 = vmatpush1.msra.mxu0 0.0
  %88 = vmatprep.subr.mxu0 0.0
  %89 = vmatpush1.msra.mxu0 0.0
  %90 = vmatprep.subr.mxu0 0.0
  %91 = vmatpush1.msra.mxu0 0.0
  %92 = vmatprep.subr.mxu0 0.0
  %93 = vmatpush1.msra.mxu0 0.0
  %94 = vmatprep.subr.mxu0 0.0
  %95 = vmatpush1.msra.mxu0 0.0
  %96 = vmatprep.subr.mxu0 0.0
  %97 = vmatpush1.msra.mxu0 0.0
  %98 = vmatprep.subr.mxu0 0.0
  %99 = vmatpush1.msra.mxu0 0.0
  %100 = vmatprep.subr.mxu0 0.0
  %101 = vmatpush1.msra.mxu0 0.0
  %102 = vmatprep.subr.mxu0 0.0
  %103 = vmatpush1.msra.mxu0 0.0
  %104 = vmatprep.subr.mxu0 0.0
  %105 = vmatpush1.msra.mxu0 0.0
  %106 = vmatprep.subr.mxu0 0.0
  %107 = vmatpush1.msra.mxu0 0.0
  %108 = vmatprep.subr.mxu0 0.0
  %109 = vmatpush1.msra.mxu0 0.0
  %110 = vmatprep.subr.mxu0 0.0
  %111 = vmatpush1.msra.mxu0 0.0
  %112 = vmatprep.subr.mxu0 0.0
  %113 = vmatpush1.msra.mxu0 0.0
  %114 = vmatprep.subr.mxu0 0.0
  %115 = vmatpush1.msra.mxu0 0.0
  %116 = vmatprep.subr.mxu0 0.0
  %117 = vmatpush1.msra.mxu0 0.0
  %118 = vmatprep.subr.mxu0 0.0
  %119 = vmatpush1.msra.mxu0 0.0
  %120 = vmatprep.subr.mxu0 0.0
  %121 = vmatpush1.msra.mxu0 0.0
  %122 = vmatprep.subr.mxu0 0.0
  %123 = vmatpush1.msra.mxu0 0.0
  %124 = vmatprep.subr.mxu0 0.0
  %125 = vmatpush1.msra.mxu0 0.0
  %126 = vmatprep.subr.mxu0 0.0
  %127 = vmatpush1.msra.mxu0 0.0
  %128 = vmatprep.subr.mxu0 0.0
  %129 = vmatpush1.msra.mxu0 0.0
  %130 = vmatprep.subr.mxu0 0.0
  %131 = vmatpush1.msra.mxu0 0.0
  %132 = vmatprep.subr.mxu0 0.0
  %133 = vmatpush1.msra.mxu0 0.0
  %134 = vmatprep.subr.mxu0 0.0
  %135 = vmatpush1.msra.mxu0 0.0
  %136 = vmatprep.subr.mxu0 0.0
  %137 = vmatpush1.msra.mxu0 0.0
  %138 = vmatprep.mubr.f32.mxu0 0.0
  %139 = vmatmul.mubr.f32.gmra.mrb[0].mxu0 %v51
  %v140 = vpop.f32.mrb[0].mxu0
  %v141 = vadd.f32 %v47, %v140
  %v142 = vpop.f32.mrb[0].mxu0
  %143 = vmatprep.mubr.f32.mxu0 0.0
  %144 = vmatmul.mubr.f32.gmra.mrb[0].mxu0 %v54
  %v145 = vpop.f32.mrb[0].mxu0
  %v146 = vadd.f32 %v47, %v145
  %v147 = vpop.f32.mrb[0].mxu0
  %148 = vmatprep.mubr.f32.mxu0 0.0
  %149 = vmatmul.mubr.f32.gmra.mrb[0].mxu0 %v57
  %v150 = vpop.f32.mrb[0].mxu0
  %v151 = vadd.f32 %v47, %v150
  %v152 = vpop.f32.mrb[0].mxu0
  %153 = vmatprep.mubr.f32.mxu0 0.0
  %154 = vmatmul.mubr.f32.gmra.mrb[0].mxu0 %v60
  %v155 = vpop.f32.mrb[0].mxu0
  %v156 = vadd.f32 %v47, %v155
  %v157 = vpop.f32.mrb[0].mxu0
  %158 = vmatprep.mubr.f32.mxu0 0.0
  %159 = vmatmul.mubr.f32.gmra.mrb[0].mxu0 %v63
  %v160 = vpop.f32.mrb[0].mxu0
  %v161 = vadd.f32 %v47, %v160
  %v162 = vpop.f32.mrb[0].mxu0
  %163 = vmatprep.mubr.f32.mxu0 0.0
  %164 = vmatmul.mubr.f32.gmra.mrb[0].mxu0 %v66
  %v165 = vpop.f32.mrb[0].mxu0
  %v166 = vadd.f32 %v47, %v165
  %v167 = vpop.f32.mrb[0].mxu0
  %168 = vmatprep.mubr.f32.mxu0 0.0
  %169 = vmatmul.mubr.f32.gmra.mrb[0].mxu0 %v69
  %v170 = vpop.f32.mrb[0].mxu0
  %v171 = vadd.f32 %v47, %v170
  %v172 = vpop.f32.mrb[0].mxu0
  %173 = vmatprep.mubr.f32.mxu0 0.0
  %174 = vmatmul.mubr.f32.gmra.mrb[0].mxu0 %v72
  %v175 = vpop.f32.mrb[0].mxu0
  %v176 = vadd.f32 %v47, %v175
  %v177 = vpop.f32.mrb[0].mxu0
  %178 = vdwg.mxu0
  %vm179 = vcmask 785408
  %180 = vst.msk [vmem:[#allocation2] sm:$0xff] %vm179, %v141
  %181 = vst.msk [vmem:[#allocation2 + $0x8] sm:$0xff] %vm179, %v146
  %182 = vst.msk [vmem:[#allocation2 + $0x10] sm:$0xff] %vm179, %v151
  %183 = vst.msk [vmem:[#allocation2 + $0x18] sm:$0xff] %vm179, %v156
  %184 = vst.msk [vmem:[#allocation2 + $0x20] sm:$0xff] %vm179, %v161
  %185 = vst.msk [vmem:[#allocation2 + $0x28] sm:$0xff] %vm179, %v166
  %186 = vst.msk [vmem:[#allocation2 + $0x30] sm:$0xff] %vm179, %v171
  %187 = vst.msk [vmem:[#allocation2 + $0x38] sm:$0xff] %vm179, %v176
  %v188 = vld [vmem:[%s3] sm:$0xff]
  %v189 = vld [vmem:[%s3 + $0x8] sm:$0xff]
  %v190 = vld [vmem:[%s4] sm:$0x1]
  %v192 = vlaneseq
  %v193 = vshrl.u32 %v192, 7
  %v194 = vsub.s32 0, %v193
  %v195 = vrot.slane %v190, %v194
  %197 = vmatprep.subr.mxu0 0.0
  %198 = vmatpush1.msra.mxu0 %v188
  %199 = vmatprep.subr.mxu0 0.0
  %200 = vmatpush1.msra.mxu0 %v189
  %201 = vmatprep.subr.mxu0 0.0
  %202 = vmatpush1.msra.mxu0 0.0
  %203 = vmatprep.subr.mxu0 0.0
  %204 = vmatpush1.msra.mxu0 0.0
  %205 = vmatprep.subr.mxu0 0.0
  %206 = vmatpush1.msra.mxu0 0.0
  %207 = vmatprep.subr.mxu0 0.0
  %208 = vmatpush1.msra.mxu0 0.0
  %209 = vmatprep.subr.mxu0 0.0
  %210 = vmatpush1.msra.mxu0 0.0
  %211 = vmatprep.subr.mxu0 0.0
  %212 = vmatpush1.msra.mxu0 0.0
  %213 = vmatprep.subr.mxu0 0.0
  %214 = vmatpush1.msra.mxu0 0.0
  %215 = vmatprep.subr.mxu0 0.0
  %216 = vmatpush1.msra.mxu0 0.0
  %217 = vmatprep.subr.mxu0 0.0
  %218 = vmatpush1.msra.mxu0 0.0
  %219 = vmatprep.subr.mxu0 0.0
  %220 = vmatpush1.msra.mxu0 0.0
  %221 = vmatprep.subr.mxu0 0.0
  %222 = vmatpush1.msra.mxu0 0.0
  %223 = vmatprep.subr.mxu0 0.0
  %224 = vmatpush1.msra.mxu0 0.0
  %225 = vmatprep.subr.mxu0 0.0
  %226 = vmatpush1.msra.mxu0 0.0
  %227 = vmatprep.subr.mxu0 0.0
  %228 = vmatpush1.msra.mxu0 0.0
  %229 = vmatprep.subr.mxu0 0.0
  %230 = vmatpush1.msra.mxu0 0.0
  %231 = vmatprep.subr.mxu0 0.0
  %232 = vmatpush1.msra.mxu0 0.0
  %233 = vmatprep.subr.mxu0 0.0
  %234 = vmatpush1.msra.mxu0 0.0
  %235 = vmatprep.subr.mxu0 0.0
  %236 = vmatpush1.msra.mxu0 0.0
  %237 = vmatprep.subr.mxu0 0.0
  %238 = vmatpush1.msra.mxu0 0.0
  %239 = vmatprep.subr.mxu0 0.0
  %240 = vmatpush1.msra.mxu0 0.0
  %241 = vmatprep.subr.mxu0 0.0
  %242 = vmatpush1.msra.mxu0 0.0
  %243 = vmatprep.subr.mxu0 0.0
  %244 = vmatpush1.msra.mxu0 0.0
  %245 = vmatprep.subr.mxu0 0.0
  %246 = vmatpush1.msra.mxu0 0.0
  %247 = vmatprep.subr.mxu0 0.0
  %248 = vmatpush1.msra.mxu0 0.0
  %249 = vmatprep.subr.mxu0 0.0
  %250 = vmatpush1.msra.mxu0 0.0
  %251 = vmatprep.subr.mxu0 0.0
  %252 = vmatpush1.msra.mxu0 0.0
  %253 = vmatprep.subr.mxu0 0.0
  %254 = vmatpush1.msra.mxu0 0.0
  %255 = vmatprep.subr.mxu0 0.0
  %256 = vmatpush1.msra.mxu0 0.0
  %257 = vmatprep.subr.mxu0 0.0
  %258 = vmatpush1.msra.mxu0 0.0
  %259 = vmatprep.subr.mxu0 0.0
  %260 = vmatpush1.msra.mxu0 0.0
  %261 = vmatprep.mubr.f32.mxu0 0.0
  %262 = vmatmul.mubr.f32.gmra.mrb[0].mxu0 %v51
  %v263 = vpop.f32.mrb[0].mxu0
  %v264 = vadd.f32 %v195, %v263
  %v265 = vpop.f32.mrb[0].mxu0
  %266 = vmatprep.mubr.f32.mxu0 0.0
  %267 = vmatmul.mubr.f32.gmra.mrb[0].mxu0 %v54
  %v268 = vpop.f32.mrb[0].mxu0
  %v269 = vadd.f32 %v195, %v268
  %v270 = vpop.f32.mrb[0].mxu0
  %271 = vmatprep.mubr.f32.mxu0 0.0
  %272 = vmatmul.mubr.f32.gmra.mrb[0].mxu0 %v57
  %v273 = vpop.f32.mrb[0].mxu0
  %v274 = vadd.f32 %v195, %v273
  %v275 = vpop.f32.mrb[0].mxu0
  %276 = vmatprep.mubr.f32.mxu0 0.0
  %277 = vmatmul.mubr.f32.gmra.mrb[0].mxu0 %v60
  %v278 = vpop.f32.mrb[0].mxu0
  %v279 = vadd.f32 %v195, %v278
  %v280 = vpop.f32.mrb[0].mxu0
  %281 = vmatprep.mubr.f32.mxu0 0.0
  %282 = vmatmul.mubr.f32.gmra.mrb[0].mxu0 %v63
  %v283 = vpop.f32.mrb[0].mxu0
  %v284 = vadd.f32 %v195, %v283
  %v285 = vpop.f32.mrb[0].mxu0
  %286 = vmatprep.mubr.f32.mxu0 0.0
  %287 = vmatmul.mubr.f32.gmra.mrb[0].mxu0 %v66
  %v288 = vpop.f32.mrb[0].mxu0
  %v289 = vadd.f32 %v195, %v288
  %v290 = vpop.f32.mrb[0].mxu0
  %291 = vmatprep.mubr.f32.mxu0 0.0
  %292 = vmatmul.mubr.f32.gmra.mrb[0].mxu0 %v69
  %v293 = vpop.f32.mrb[0].mxu0
  %v294 = vadd.f32 %v195, %v293
  %v295 = vpop.f32.mrb[0].mxu0
  %296 = vmatprep.mubr.f32.mxu0 0.0
  %297 = vmatmul.mubr.f32.gmra.mrb[0].mxu0 %v72
  %v298 = vpop.f32.mrb[0].mxu0
  %v299 = vadd.f32 %v195, %v298
  %v300 = vpop.f32.mrb[0].mxu0
  %301 = vdwg.mxu0
  %302 = vst.msk [vmem:[#allocation3] sm:$0xff] %vm179, %v264
  %303 = vst.msk [vmem:[#allocation3 + $0x8] sm:$0xff] %vm179, %v269
  %304 = vst.msk [vmem:[#allocation3 + $0x10] sm:$0xff] %vm179, %v274
  %305 = vst.msk [vmem:[#allocation3 + $0x18] sm:$0xff] %vm179, %v279
  %306 = vst.msk [vmem:[#allocation3 + $0x20] sm:$0xff] %vm179, %v284
  %307 = vst.msk [vmem:[#allocation3 + $0x28] sm:$0xff] %vm179, %v289
  %308 = vst.msk [vmem:[#allocation3 + $0x30] sm:$0xff] %vm179, %v294
  %309 = vst.msk [vmem:[#allocation3 + $0x38] sm:$0xff] %vm179, %v299
  %v310 = vld [vmem:[%s5] sm:$0xff]
  %v311 = vld [vmem:[%s5 + $0x8] sm:$0xff]
  %v312 = vld [vmem:[%s5 + $0x10] sm:$0xff]
  %v313 = vld [vmem:[%s5 + $0x18] sm:$0xff]
  %v314 = vld [vmem:[%s5 + $0x20] sm:$0xff]
  %v315 = vld [vmem:[%s5 + $0x28] sm:$0xff]
  %v316 = vld [vmem:[%s5 + $0x30] sm:$0xff]
  %v317 = vld [vmem:[%s5 + $0x38] sm:$0xff]
  %v318 = vld [vmem:[%s5 + $0x40] sm:$0xff]
  %v319 = vld [vmem:[%s5 + $0x48] sm:$0xff]
  %v320 = vld [vmem:[%s5 + $0x50] sm:$0xff]
  %v321 = vld [vmem:[%s5 + $0x58] sm:$0xff]
  %v322 = vld [vmem:[%s5 + $0x60] sm:$0xff]
  %v323 = vld [vmem:[%s5 + $0x68] sm:$0xff]
  %v324 = vld [vmem:[%s5 + $0x70] sm:$0xff]
  %v325 = vld [vmem:[%s5 + $0x78] sm:$0xff]
  %v326 = vld [vmem:[%s6] sm:$0x3]
  %v328 = vlaneseq
  %v329 = vshrl.u32 %v328, 7
  %v330 = vsub.s32 0, %v329
  %v331 = vrot.slane %v326, %v330
  %v332 = vlaneseq
  %v333 = vshrl.u32 %v332, 7
  %v334 = vsub.s32 1, %v333
  %v335 = vrot.slane %v326, %v334
  %vm338 = vcmask 523264
  %v340 = vsel %vm338, 0.0, 0
  %342 = vmatprep.subr.mxu0 %v311
  %343 = vmatpush1.msra.mxu0 %v310
  %344 = vmatprep.subr.mxu0 %v313
  %345 = vmatpush1.msra.mxu0 %v312
  %346 = vmatprep.subr.mxu0 %v315
  %347 = vmatpush1.msra.mxu0 %v314
  %348 = vmatprep.subr.mxu0 %v317
  %349 = vmatpush1.msra.mxu0 %v316
  %350 = vmatprep.subr.mxu0 %v319
  %351 = vmatpush1.msra.mxu0 %v318
  %352 = vmatprep.subr.mxu0 %v321
  %353 = vmatpush1.msra.mxu0 %v320
  %354 = vmatprep.subr.mxu0 %v323
  %355 = vmatpush1.msra.mxu0 %v322
  %356 = vmatprep.subr.mxu0 %v325
  %357 = vmatpush1.msra.mxu0 %v324
  %358 = vmatprep.subr.mxu0 0.0
  %359 = vmatpush1.msra.mxu0 0.0
  %360 = vmatprep.subr.mxu0 0.0
  %361 = vmatpush1.msra.mxu0 0.0
  %362 = vmatprep.subr.mxu0 0.0
  %363 = vmatpush1.msra.mxu0 0.0
  %364 = vmatprep.subr.mxu0 0.0
  %365 = vmatpush1.msra.mxu0 0.0
  %366 = vmatprep.subr.mxu0 0.0
  %367 = vmatpush1.msra.mxu0 0.0
  %368 = vmatprep.subr.mxu0 0.0
  %369 = vmatpush1.msra.mxu0 0.0
  %370 = vmatprep.subr.mxu0 0.0
  %371 = vmatpush1.msra.mxu0 0.0
  %372 = vmatprep.subr.mxu0 0.0
  %373 = vmatpush1.msra.mxu0 0.0
  %374 = vmatprep.subr.mxu0 0.0
  %375 = vmatpush1.msra.mxu0 0.0
  %376 = vmatprep.subr.mxu0 0.0
  %377 = vmatpush1.msra.mxu0 0.0
  %378 = vmatprep.subr.mxu0 0.0
  %379 = vmatpush1.msra.mxu0 0.0
  %380 = vmatprep.subr.mxu0 0.0
  %381 = vmatpush1.msra.mxu0 0.0
  %382 = vmatprep.subr.mxu0 0.0
  %383 = vmatpush1.msra.mxu0 0.0
  %384 = vmatprep.subr.mxu0 0.0
  %385 = vmatpush1.msra.mxu0 0.0
  %386 = vmatprep.subr.mxu0 0.0
  %387 = vmatpush1.msra.mxu0 0.0
  %388 = vmatprep.subr.mxu0 0.0
  %389 = vmatpush1.msra.mxu0 0.0
  %390 = vmatprep.subr.mxu0 0.0
  %391 = vmatpush1.msra.mxu0 0.0
  %392 = vmatprep.subr.mxu0 0.0
  %393 = vmatpush1.msra.mxu0 0.0
  %394 = vmatprep.subr.mxu0 0.0
  %395 = vmatpush1.msra.mxu0 0.0
  %396 = vmatprep.subr.mxu0 0.0
  %397 = vmatpush1.msra.mxu0 0.0
  %398 = vmatprep.subr.mxu0 0.0
  %399 = vmatpush1.msra.mxu0 0.0
  %400 = vmatprep.subr.mxu0 0.0
  %401 = vmatpush1.msra.mxu0 0.0
  %402 = vmatprep.subr.mxu0 0.0
  %403 = vmatpush1.msra.mxu0 0.0
  %404 = vmatprep.subr.mxu0 0.0
  %405 = vmatpush1.msra.mxu0 0.0
  %406 = vmatprep.mubr.f32.mxu0 0.0
  %407 = vmatmul.mubr.f32.gmra.mrb[0].mxu0 %v340
  %v408 = vpop.f32.mrb[0].mxu0
  %v409 = vadd.f32 %v331, %v408
  %v410 = vpop.f32.mrb[0].mxu0
  %v411 = vadd.f32 %v335, %v410
  %412 = vdwg.mxu0
  %v413 = vld [vmem:[#allocation2] sm:$0xff]
  %v414 = vadd.f32 %v413, %v409
  %v415 = vxor.u32 %v414, 2147483648
  %v416 = vmul.f32 %v415, 1.442695
  %v417 = vpow.pop %v416
  %v418 = vadd.f32 %v417, 1.0
  %v419 = vrcp.pop %v418
  %v420 = vmul.f32 1.0, %v419
  %422 = vrot.lane.b32.xlu0 %v409, 64
  %v423 = vpop.permute.xlu0 %422
  %v425 = vmul.f32 %v420, %v423
  %427 = vrot.lane.b32.xlu0 %v425, 64
  %v428 = vpop.permute.xlu0 %427
  %v430 = vadd.f32 %v413, %v428
  %v431 = vtanh.pop %v430
  %v432 = vsub.f32 1.0, %v420
  %434 = vrot.lane.b32.xlu0 %v431, 96
  %v435 = vpop.permute.xlu0 %434
  %v437 = vmul.f32 %v432, %v435
  %v438 = vmul.f32 %v420, 0.0
  %v439 = vadd.f32 %v437, %v438
  %s440 = scalar_lea.vmem [#allocation3], 56
  %v441 = vld [vmem:[%s440] sm:$0xff]
  %442 = vrot.lane.b32.xlu0 %v409, 32
  %v443 = vpop.permute.xlu0 %442
  %v445 = vadd.f32 %v441, %v443
  %v446 = vxor.u32 %v445, 2147483648
  %v447 = vmul.f32 %v446, 1.442695
  %v448 = vpow.pop %v447
  %v449 = vadd.f32 %v448, 1.0
  %v450 = vrcp.pop %v449
  %v451 = vmul.f32 1.0, %v450
  %453 = vrot.lane.b32.xlu0 %v411, 32
  %v454 = vpop.permute.xlu0 %453
  %v456 = vadd.f32 %v441, %v454
  %v457 = vxor.u32 %v456, 2147483648
  %v458 = vmul.f32 %v457, 1.442695
  %v459 = vpow.pop %v458
  %v460 = vadd.f32 %v459, 1.0
  %v461 = vrcp.pop %v460
  %v462 = vmul.f32 1.0, %v461
  %463 = vrot.lane.b32.xlu0 %v411, 96
  %v464 = vpop.permute.xlu0 %463
  %v466 = vmul.f32 %v451, %v464
  %468 = vrot.lane.b32.xlu0 %v466, 64
  %v469 = vpop.permute.xlu0 %468
  %v471 = vadd.f32 %v441, %v469
  %v472 = vtanh.pop %v471
  %v473 = vsub.f32 1.0, %v462
  %475 = vrot.lane.b32.xlu0 %v472, 96
  %v476 = vpop.permute.xlu0 %475
  %v478 = vmul.f32 %v473, %v476
  %v479 = vmul.f32 %v462, 0.0
  %v480 = vadd.f32 %v478, %v479
  %482 = vrot.lane.b32.xlu0 %v439, 96
  %v483 = vpop.permute.xlu0 %482
  %vm485 = vcmask 261120
  %486 = vst.msk [vmem:[#allocation4] sm:$0xff] %vm485, %v483
  %488 = vrot.lane.b32.xlu0 %v480, 96
  %v489 = vpop.permute.xlu0 %488
  %s491 = scalar_lea.vmem [#allocation5], 56
  %492 = vst.msk [vmem:[%s491] sm:$0xff] %vm485, %v489
  %v493 = vsel %vm485, %v483, %v480
  %v495 = vsel %vm338, %v493, 0
  %497 = vmatprep.subr.mxu0 %v311
  %498 = vmatpush1.msra.mxu0 %v310
  %499 = vmatprep.subr.mxu0 %v313
  %500 = vmatpush1.msra.mxu0 %v312
  %501 = vmatprep.subr.mxu0 %v315
  %502 = vmatpush1.msra.mxu0 %v314
  %503 = vmatprep.subr.mxu0 %v317
  %504 = vmatpush1.msra.mxu0 %v316
  %505 = vmatprep.subr.mxu0 %v319
  %506 = vmatpush1.msra.mxu0 %v318
  %507 = vmatprep.subr.mxu0 %v321
  %508 = vmatpush1.msra.mxu0 %v320
  %509 = vmatprep.subr.mxu0 %v323
  %510 = vmatpush1.msra.mxu0 %v322
  %511 = vmatprep.subr.mxu0 %v325
  %512 = vmatpush1.msra.mxu0 %v324
  %513 = vmatprep.subr.mxu0 0.0
  %514 = vmatpush1.msra.mxu0 0.0
  %515 = vmatprep.subr.mxu0 0.0
  %516 = vmatpush1.msra.mxu0 0.0
  %517 = vmatprep.subr.mxu0 0.0
  %518 = vmatpush1.msra.mxu0 0.0
  %519 = vmatprep.subr.mxu0 0.0
  %520 = vmatpush1.msra.mxu0 0.0
  %521 = vmatprep.subr.mxu0 0.0
  %522 = vmatpush1.msra.mxu0 0.0
  %523 = vmatprep.subr.mxu0 0.0
  %524 = vmatpush1.msra.mxu0 0.0
  %525 = vmatprep.subr.mxu0 0.0
  %526 = vmatpush1.msra.mxu0 0.0
  %527 = vmatprep.subr.mxu0 0.0
  %528 = vmatpush1.msra.mxu0 0.0
  %529 = vmatprep.subr.mxu0 0.0
  %530 = vmatpush1.msra.mxu0 0.0
  %531 = vmatprep.subr.mxu0 0.0
  %532 = vmatpush1.msra.mxu0 0.0
  %533 = vmatprep.subr.mxu0 0.0
  %534 = vmatpush1.msra.mxu0 0.0
  %535 = vmatprep.subr.mxu0 0.0
  %536 = vmatpush1.msra.mxu0 0.0
  %537 = vmatprep.subr.mxu0 0.0
  %538 = vmatpush1.msra.mxu0 0.0
  %539 = vmatprep.subr.mxu0 0.0
  %540 = vmatpush1.msra.mxu0 0.0
  %541 = vmatprep.subr.mxu0 0.0
  %542 = vmatpush1.msra.mxu0 0.0
  %543 = vmatprep.subr.mxu0 0.0
  %544 = vmatpush1.msra.mxu0 0.0
  %545 = vmatprep.subr.mxu0 0.0
  %546 = vmatpush1.msra.mxu0 0.0
  %547 = vmatprep.subr.mxu0 0.0
  %548 = vmatpush1.msra.mxu0 0.0
  %549 = vmatprep.subr.mxu0 0.0
  %550 = vmatpush1.msra.mxu0 0.0
  %551 = vmatprep.subr.mxu0 0.0
  %552 = vmatpush1.msra.mxu0 0.0
  %553 = vmatprep.subr.mxu0 0.0
  %554 = vmatpush1.msra.mxu0 0.0
  %555 = vmatprep.subr.mxu0 0.0
  %556 = vmatpush1.msra.mxu0 0.0
  %557 = vmatprep.subr.mxu0 0.0
  %558 = vmatpush1.msra.mxu0 0.0
  %559 = vmatprep.subr.mxu0 0.0
  %560 = vmatpush1.msra.mxu0 0.0
  %561 = vmatprep.mubr.f32.mxu0 0.0
  %562 = vmatmul.mubr.f32.gmra.mrb[0].mxu0 %v495
  %v563 = vpop.f32.mrb[0].mxu0
  %v564 = vadd.f32 %v331, %v563
  %v565 = vpop.f32.mrb[0].mxu0
  %v566 = vadd.f32 %v335, %v565
  %567 = vdwg.mxu0
  %s568 = scalar_lea.vmem [#allocation2], 8
  %v569 = vld [vmem:[%s568] sm:$0xff]
  %v570 = vadd.f32 %v569, %v564
  %v571 = vxor.u32 %v570, 2147483648
  %v572 = vmul.f32 %v571, 1.442695
  %v573 = vpow.pop %v572
  %v574 = vadd.f32 %v573, 1.0
  %v575 = vrcp.pop %v574
  %v576 = vmul.f32 1.0, %v575
  %578 = vrot.lane.b32.xlu0 %v564, 64
  %v579 = vpop.permute.xlu0 %578
  %v581 = vmul.f32 %v576, %v579
  %583 = vrot.lane.b32.xlu0 %v581, 64
  %v584 = vpop.permute.xlu0 %583
  %v586 = vadd.f32 %v569, %v584
  %v587 = vtanh.pop %v586
  %v588 = vsub.f32 1.0, %v576
  %590 = vrot.lane.b32.xlu0 %v587, 96
  %v591 = vpop.permute.xlu0 %590
  %v593 = vmul.f32 %v588, %v591
  %594 = vrot.lane.b32.xlu0 %v493, 32
  %v595 = vpop.permute.xlu0 %594
  %v597 = vmul.f32 %v576, %v595
  %v598 = vadd.f32 %v593, %v597
  %s599 = scalar_lea.vmem [#allocation3], 48
  %v600 = vld [vmem:[%s599] sm:$0xff]
  %601 = vrot.lane.b32.xlu0 %v564, 32
  %v602 = vpop.permute.xlu0 %601
  %v604 = vadd.f32 %v600, %v602
  %v605 = vxor.u32 %v604, 2147483648
  %v606 = vmul.f32 %v605, 1.442695
  %v607 = vpow.pop %v606
  %v608 = vadd.f32 %v607, 1.0
  %v609 = vrcp.pop %v608
  %v610 = vmul.f32 1.0, %v609
  %612 = vrot.lane.b32.xlu0 %v566, 32
  %v613 = vpop.permute.xlu0 %612
  %v615 = vadd.f32 %v600, %v613
  %v616 = vxor.u32 %v615, 2147483648
  %v617 = vmul.f32 %v616, 1.442695
  %v618 = vpow.pop %v617
  %v619 = vadd.f32 %v618, 1.0
  %v620 = vrcp.pop %v619
  %v621 = vmul.f32 1.0, %v620
  %622 = vrot.lane.b32.xlu0 %v566, 96
  %v623 = vpop.permute.xlu0 %622
  %v625 = vmul.f32 %v610, %v623
  %627 = vrot.lane.b32.xlu0 %v625, 64
  %v628 = vpop.permute.xlu0 %627
  %v630 = vadd.f32 %v600, %v628
  %v631 = vtanh.pop %v630
  %v632 = vsub.f32 1.0, %v621
  %634 = vrot.lane.b32.xlu0 %v631, 96
  %v635 = vpop.permute.xlu0 %634
  %v637 = vmul.f32 %v632, %v635
  %v638 = vmul.f32 %v621, %v493
  %v639 = vadd.f32 %v637, %v638
  %641 = vrot.lane.b32.xlu0 %v598, 96
  %v642 = vpop.permute.xlu0 %641
  %s644 = scalar_lea.vmem [#allocation4], 8
  %645 = vst.msk [vmem:[%s644] sm:$0xff] %vm485, %v642
  %647 = vrot.lane.b32.xlu0 %v639, 96
  %v648 = vpop.permute.xlu0 %647
  %s650 = scalar_lea.vmem [#allocation5], 48
  %651 = vst.msk [vmem:[%s650] sm:$0xff] %vm485, %v648
  %v652 = vsel %vm485, %v642, %v639
  %v654 = vsel %vm338, %v652, 0
  %656 = vmatprep.subr.mxu0 %v311
  %657 = vmatpush1.msra.mxu0 %v310
  %658 = vmatprep.subr.mxu0 %v313
  %659 = vmatpush1.msra.mxu0 %v312
  %660 = vmatprep.subr.mxu0 %v315
  %661 = vmatpush1.msra.mxu0 %v314
  %662 = vmatprep.subr.mxu0 %v317
  %663 = vmatpush1.msra.mxu0 %v316
  %664 = vmatprep.subr.mxu0 %v319
  %665 = vmatpush1.msra.mxu0 %v318
  %666 = vmatprep.subr.mxu0 %v321
  %667 = vmatpush1.msra.mxu0 %v320
  %668 = vmatprep.subr.mxu0 %v323
  %669 = vmatpush1.msra.mxu0 %v322
  %670 = vmatprep.subr.mxu0 %v325
  %671 = vmatpush1.msra.mxu0 %v324
  %672 = vmatprep.subr.mxu0 0.0
  %673 = vmatpush1.msra.mxu0 0.0
  %674 = vmatprep.subr.mxu0 0.0
  %675 = vmatpush1.msra.mxu0 0.0
  %676 = vmatprep.subr.mxu0 0.0
  %677 = vmatpush1.msra.mxu0 0.0
  %678 = vmatprep.subr.mxu0 0.0
  %679 = vmatpush1.msra.mxu0 0.0
  %680 = vmatprep.subr.mxu0 0.0
  %681 = vmatpush1.msra.mxu0 0.0
  %682 = vmatprep.subr.mxu0 0.0
  %683 = vmatpush1.msra.mxu0 0.0
  %684 = vmatprep.subr.mxu0 0.0
  %685 = vmatpush1.msra.mxu0 0.0
  %686 = vmatprep.subr.mxu0 0.0
  %687 = vmatpush1.msra.mxu0 0.0
  %688 = vmatprep.subr.mxu0 0.0
  %689 = vmatpush1.msra.mxu0 0.0
  %690 = vmatprep.subr.mxu0 0.0
  %691 = vmatpush1.msra.mxu0 0.0
  %692 = vmatprep.subr.mxu0 0.0
  %693 = vmatpush1.msra.mxu0 0.0
  %694 = vmatprep.subr.mxu0 0.0
  %695 = vmatpush1.msra.mxu0 0.0
  %696 = vmatprep.subr.mxu0 0.0
  %697 = vmatpush1.msra.mxu0 0.0
  %698 = vmatprep.subr.mxu0 0.0
  %699 = vmatpush1.msra.mxu0 0.0
  %700 = vmatprep.subr.mxu0 0.0
  %701 = vmatpush1.msra.mxu0 0.0
  %702 = vmatprep.subr.mxu0 0.0
  %703 = vmatpush1.msra.mxu0 0.0
  %704 = vmatprep.subr.mxu0 0.0
  %705 = vmatpush1.msra.mxu0 0.0
  %706 = vmatprep.subr.mxu0 0.0
  %707 = vmatpush1.msra.mxu0 0.0
  %708 = vmatprep.subr.mxu0 0.0
  %709 = vmatpush1.msra.mxu0 0.0
  %710 = vmatprep.subr.mxu0 0.0
  %711 = vmatpush1.msra.mxu0 0.0
  %712 = vmatprep.subr.mxu0 0.0
  %713 = vmatpush1.msra.mxu0 0.0
  %714 = vmatprep.subr.mxu0 0.0
  %715 = vmatpush1.msra.mxu0 0.0
  %716 = vmatprep.subr.mxu0 0.0
  %717 = vmatpush1.msra.mxu0 0.0
  %718 = vmatprep.subr.mxu0 0.0
  %719 = vmatpush1.msra.mxu0 0.0
  %720 = vmatprep.mubr.f32.mxu0 0.0
  %721 = vmatmul.mubr.f32.gmra.mrb[0].mxu0 %v654
  %v722 = vpop.f32.mrb[0].mxu0
  %v723 = vadd.f32 %v331, %v722
  %v724 = vpop.f32.mrb[0].mxu0
  %v725 = vadd.f32 %v335, %v724
  %726 = vdwg.mxu0
  %s727 = scalar_lea.vmem [#allocation2], 16
  %v728 = vld [vmem:[%s727] sm:$0xff]
  %v729 = vadd.f32 %v728, %v723
  %v730 = vxor.u32 %v729, 2147483648
  %v731 = vmul.f32 %v730, 1.442695
  %v732 = vpow.pop %v731
  %v733 = vadd.f32 %v732, 1.0
  %v734 = vrcp.pop %v733
  %v735 = vmul.f32 1.0, %v734
  %737 = vrot.lane.b32.xlu0 %v723, 64
  %v738 = vpop.permute.xlu0 %737
  %v740 = vmul.f32 %v735, %v738
  %742 = vrot.lane.b32.xlu0 %v740, 64
  %v743 = vpop.permute.xlu0 %742
  %v745 = vadd.f32 %v728, %v743
  %v746 = vtanh.pop %v745
  %v747 = vsub.f32 1.0, %v735
  %749 = vrot.lane.b32.xlu0 %v746, 96
  %v750 = vpop.permute.xlu0 %749
  %v752 = vmul.f32 %v747, %v750
  %753 = vrot.lane.b32.xlu0 %v652, 32
  %v754 = vpop.permute.xlu0 %753
  %v756 = vmul.f32 %v735, %v754
  %v757 = vadd.f32 %v752, %v756
  %s758 = scalar_lea.vmem [#allocation3], 40
  %v759 = vld [vmem:[%s758] sm:$0xff]
  %760 = vrot.lane.b32.xlu0 %v723, 32
  %v761 = vpop.permute.xlu0 %760
  %v763 = vadd.f32 %v759, %v761
  %v764 = vxor.u32 %v763, 2147483648
  %v765 = vmul.f32 %v764, 1.442695
  %v766 = vpow.pop %v765
  %v767 = vadd.f32 %v766, 1.0
  %v768 = vrcp.pop %v767
  %v769 = vmul.f32 1.0, %v768
  %771 = vrot.lane.b32.xlu0 %v725, 32
  %v772 = vpop.permute.xlu0 %771
  %v774 = vadd.f32 %v759, %v772
  %v775 = vxor.u32 %v774, 2147483648
  %v776 = vmul.f32 %v775, 1.442695
  %v777 = vpow.pop %v776
  %v778 = vadd.f32 %v777, 1.0
  %v779 = vrcp.pop %v778
  %v780 = vmul.f32 1.0, %v779
  %781 = vrot.lane.b32.xlu0 %v725, 96
  %v782 = vpop.permute.xlu0 %781
  %v784 = vmul.f32 %v769, %v782
  %786 = vrot.lane.b32.xlu0 %v784, 64
  %v787 = vpop.permute.xlu0 %786
  %v789 = vadd.f32 %v759, %v787
  %v790 = vtanh.pop %v789
  %v791 = vsub.f32 1.0, %v780
  %793 = vrot.lane.b32.xlu0 %v790, 96
  %v794 = vpop.permute.xlu0 %793
  %v796 = vmul.f32 %v791, %v794
  %v797 = vmul.f32 %v780, %v652
  %v798 = vadd.f32 %v796, %v797
  %800 = vrot.lane.b32.xlu0 %v757, 96
  %v801 = vpop.permute.xlu0 %800
  %s803 = scalar_lea.vmem [#allocation4], 16
  %804 = vst.msk [vmem:[%s803] sm:$0xff] %vm485, %v801
  %806 = vrot.lane.b32.xlu0 %v798, 96
  %v807 = vpop.permute.xlu0 %806
  %s809 = scalar_lea.vmem [#allocation5], 40
  %810 = vst.msk [vmem:[%s809] sm:$0xff] %vm485, %v807
  %v811 = vsel %vm485, %v801, %v798
  %v813 = vsel %vm338, %v811, 0
  %815 = vmatprep.subr.mxu0 %v311
  %816 = vmatpush1.msra.mxu0 %v310
  %817 = vmatprep.subr.mxu0 %v313
  %818 = vmatpush1.msra.mxu0 %v312
  %819 = vmatprep.subr.mxu0 %v315
  %820 = vmatpush1.msra.mxu0 %v314
  %821 = vmatprep.subr.mxu0 %v317
  %822 = vmatpush1.msra.mxu0 %v316
  %823 = vmatprep.subr.mxu0 %v319
  %824 = vmatpush1.msra.mxu0 %v318
  %825 = vmatprep.subr.mxu0 %v321
  %826 = vmatpush1.msra.mxu0 %v320
  %827 = vmatprep.subr.mxu0 %v323
  %828 = vmatpush1.msra.mxu0 %v322
  %829 = vmatprep.subr.mxu0 %v325
  %830 = vmatpush1.msra.mxu0 %v324
  %831 = vmatprep.subr.mxu0 0.0
  %832 = vmatpush1.msra.mxu0 0.0
  %833 = vmatprep.subr.mxu0 0.0
  %834 = vmatpush1.msra.mxu0 0.0
  %835 = vmatprep.subr.mxu0 0.0
  %836 = vmatpush1.msra.mxu0 0.0
  %837 = vmatprep.subr.mxu0 0.0
  %838 = vmatpush1.msra.mxu0 0.0
  %839 = vmatprep.subr.mxu0 0.0
  %840 = vmatpush1.msra.mxu0 0.0
  %841 = vmatprep.subr.mxu0 0.0
  %842 = vmatpush1.msra.mxu0 0.0
  %843 = vmatprep.subr.mxu0 0.0
  %844 = vmatpush1.msra.mxu0 0.0
  %845 = vmatprep.subr.mxu0 0.0
  %846 = vmatpush1.msra.mxu0 0.0
  %847 = vmatprep.subr.mxu0 0.0
  %848 = vmatpush1.msra.mxu0 0.0
  %849 = vmatprep.subr.mxu0 0.0
  %850 = vmatpush1.msra.mxu0 0.0
  %851 = vmatprep.subr.mxu0 0.0
  %852 = vmatpush1.msra.mxu0 0.0
  %853 = vmatprep.subr.mxu0 0.0
  %854 = vmatpush1.msra.mxu0 0.0
  %855 = vmatprep.subr.mxu0 0.0
  %856 = vmatpush1.msra.mxu0 0.0
  %857 = vmatprep.subr.mxu0 0.0
  %858 = vmatpush1.msra.mxu0 0.0
  %859 = vmatprep.subr.mxu0 0.0
  %860 = vmatpush1.msra.mxu0 0.0
  %861 = vmatprep.subr.mxu0 0.0
  %862 = vmatpush1.msra.mxu0 0.0
  %863 = vmatprep.subr.mxu0 0.0
  %864 = vmatpush1.msra.mxu0 0.0
  %865 = vmatprep.subr.mxu0 0.0
  %866 = vmatpush1.msra.mxu0 0.0
  %867 = vmatprep.subr.mxu0 0.0
  %868 = vmatpush1.msra.mxu0 0.0
  %869 = vmatprep.subr.mxu0 0.0
  %870 = vmatpush1.msra.mxu0 0.0
  %871 = vmatprep.subr.mxu0 0.0
  %872 = vmatpush1.msra.mxu0 0.0
  %873 = vmatprep.subr.mxu0 0.0
  %874 = vmatpush1.msra.mxu0 0.0
  %875 = vmatprep.subr.mxu0 0.0
  %876 = vmatpush1.msra.mxu0 0.0
  %877 = vmatprep.subr.mxu0 0.0
  %878 = vmatpush1.msra.mxu0 0.0
  %879 = vmatprep.mubr.f32.mxu0 0.0
  %880 = vmatmul.mubr.f32.gmra.mrb[0].mxu0 %v813
  %v881 = vpop.f32.mrb[0].mxu0
  %v882 = vadd.f32 %v331, %v881
  %v883 = vpop.f32.mrb[0].mxu0
  %v884 = vadd.f32 %v335, %v883
  %885 = vdwg.mxu0
  %s886 = scalar_lea.vmem [#allocation2], 24
  %v887 = vld [vmem:[%s886] sm:$0xff]
  %v888 = vadd.f32 %v887, %v882
  %v889 = vxor.u32 %v888, 2147483648
  %v890 = vmul.f32 %v889, 1.442695
  %v891 = vpow.pop %v890
  %v892 = vadd.f32 %v891, 1.0
  %v893 = vrcp.pop %v892
  %v894 = vmul.f32 1.0, %v893
  %896 = vrot.lane.b32.xlu0 %v882, 64
  %v897 = vpop.permute.xlu0 %896
  %v899 = vmul.f32 %v894, %v897
  %901 = vrot.lane.b32.xlu0 %v899, 64
  %v902 = vpop.permute.xlu0 %901
  %v904 = vadd.f32 %v887, %v902
  %v905 = vtanh.pop %v904
  %v906 = vsub.f32 1.0, %v894
  %908 = vrot.lane.b32.xlu0 %v905, 96
  %v909 = vpop.permute.xlu0 %908
  %v911 = vmul.f32 %v906, %v909
  %912 = vrot.lane.b32.xlu0 %v811, 32
  %v913 = vpop.permute.xlu0 %912
  %v915 = vmul.f32 %v894, %v913
  %v916 = vadd.f32 %v911, %v915
  %s917 = scalar_lea.vmem [#allocation3], 32
  %v918 = vld [vmem:[%s917] sm:$0xff]
  %919 = vrot.lane.b32.xlu0 %v882, 32
  %v920 = vpop.permute.xlu0 %919
  %v922 = vadd.f32 %v918, %v920
  %v923 = vxor.u32 %v922, 2147483648
  %v924 = vmul.f32 %v923, 1.442695
  %v925 = vpow.pop %v924
  %v926 = vadd.f32 %v925, 1.0
  %v927 = vrcp.pop %v926
  %v928 = vmul.f32 1.0, %v927
  %930 = vrot.lane.b32.xlu0 %v884, 32
  %v931 = vpop.permute.xlu0 %930
  %v933 = vadd.f32 %v918, %v931
  %v934 = vxor.u32 %v933, 2147483648
  %v935 = vmul.f32 %v934, 1.442695
  %v936 = vpow.pop %v935
  %v937 = vadd.f32 %v936, 1.0
  %v938 = vrcp.pop %v937
  %v939 = vmul.f32 1.0, %v938
  %940 = vrot.lane.b32.xlu0 %v884, 96
  %v941 = vpop.permute.xlu0 %940
  %v943 = vmul.f32 %v928, %v941
  %945 = vrot.lane.b32.xlu0 %v943, 64
  %v946 = vpop.permute.xlu0 %945
  %v948 = vadd.f32 %v918, %v946
  %v949 = vtanh.pop %v948
  %v950 = vsub.f32 1.0, %v939
  %952 = vrot.lane.b32.xlu0 %v949, 96
  %v953 = vpop.permute.xlu0 %952
  %v955 = vmul.f32 %v950, %v953
  %v956 = vmul.f32 %v939, %v811
  %v957 = vadd.f32 %v955, %v956
  %959 = vrot.lane.b32.xlu0 %v916, 96
  %v960 = vpop.permute.xlu0 %959
  %s962 = scalar_lea.vmem [#allocation4], 24
  %963 = vst.msk [vmem:[%s962] sm:$0xff] %vm485, %v960
  %965 = vrot.lane.b32.xlu0 %v957, 96
  %v966 = vpop.permute.xlu0 %965
  %s968 = scalar_lea.vmem [#allocation5], 32
  %969 = vst.msk [vmem:[%s968] sm:$0xff] %vm485, %v966
  %v970 = vsel %vm485, %v960, %v957
  %v972 = vsel %vm338, %v970, 0
  %974 = vmatprep.subr.mxu0 %v311
  %975 = vmatpush1.msra.mxu0 %v310
  %976 = vmatprep.subr.mxu0 %v313
  %977 = vmatpush1.msra.mxu0 %v312
  %978 = vmatprep.subr.mxu0 %v315
  %979 = vmatpush1.msra.mxu0 %v314
  %980 = vmatprep.subr.mxu0 %v317
  %981 = vmatpush1.msra.mxu0 %v316
  %982 = vmatprep.subr.mxu0 %v319
  %983 = vmatpush1.msra.mxu0 %v318
  %984 = vmatprep.subr.mxu0 %v321
  %985 = vmatpush1.msra.mxu0 %v320
  %986 = vmatprep.subr.mxu0 %v323
  %987 = vmatpush1.msra.mxu0 %v322
  %988 = vmatprep.subr.mxu0 %v325
  %989 = vmatpush1.msra.mxu0 %v324
  %990 = vmatprep.subr.mxu0 0.0
  %991 = vmatpush1.msra.mxu0 0.0
  %992 = vmatprep.subr.mxu0 0.0
  %993 = vmatpush1.msra.mxu0 0.0
  %994 = vmatprep.subr.mxu0 0.0
  %995 = vmatpush1.msra.mxu0 0.0
  %996 = vmatprep.subr.mxu0 0.0
  %997 = vmatpush1.msra.mxu0 0.0
  %998 = vmatprep.subr.mxu0 0.0
  %999 = vmatpush1.msra.mxu0 0.0
  %1000 = vmatprep.subr.mxu0 0.0
  %1001 = vmatpush1.msra.mxu0 0.0
  %1002 = vmatprep.subr.mxu0 0.0
  %1003 = vmatpush1.msra.mxu0 0.0
  %1004 = vmatprep.subr.mxu0 0.0
  %1005 = vmatpush1.msra.mxu0 0.0
  %1006 = vmatprep.subr.mxu0 0.0
  %1007 = vmatpush1.msra.mxu0 0.0
  %1008 = vmatprep.subr.mxu0 0.0
  %1009 = vmatpush1.msra.mxu0 0.0
  %1010 = vmatprep.subr.mxu0 0.0
  %1011 = vmatpush1.msra.mxu0 0.0
  %1012 = vmatprep.subr.mxu0 0.0
  %1013 = vmatpush1.msra.mxu0 0.0
  %1014 = vmatprep.subr.mxu0 0.0
  %1015 = vmatpush1.msra.mxu0 0.0
  %1016 = vmatprep.subr.mxu0 0.0
  %1017 = vmatpush1.msra.mxu0 0.0
  %1018 = vmatprep.subr.mxu0 0.0
  %1019 = vmatpush1.msra.mxu0 0.0
  %1020 = vmatprep.subr.mxu0 0.0
  %1021 = vmatpush1.msra.mxu0 0.0
  %1022 = vmatprep.subr.mxu0 0.0
  %1023 = vmatpush1.msra.mxu0 0.0
  %1024 = vmatprep.subr.mxu0 0.0
  %1025 = vmatpush1.msra.mxu0 0.0
  %1026 = vmatprep.subr.mxu0 0.0
  %1027 = vmatpush1.msra.mxu0 0.0
  %1028 = vmatprep.subr.mxu0 0.0
  %1029 = vmatpush1.msra.mxu0 0.0
  %1030 = vmatprep.subr.mxu0 0.0
  %1031 = vmatpush1.msra.mxu0 0.0
  %1032 = vmatprep.subr.mxu0 0.0
  %1033 = vmatpush1.msra.mxu0 0.0
  %1034 = vmatprep.subr.mxu0 0.0
  %1035 = vmatpush1.msra.mxu0 0.0
  %1036 = vmatprep.subr.mxu0 0.0
  %1037 = vmatpush1.msra.mxu0 0.0
  %1038 = vmatprep.mubr.f32.mxu0 0.0
  %1039 = vmatmul.mubr.f32.gmra.mrb[0].mxu0 %v972
  %v1040 = vpop.f32.mrb[0].mxu0
  %v1041 = vadd.f32 %v331, %v1040
  %v1042 = vpop.f32.mrb[0].mxu0
  %v1043 = vadd.f32 %v335, %v1042
  %1044 = vdwg.mxu0
  %s1045 = scalar_lea.vmem [#allocation2], 32
  %v1046 = vld [vmem:[%s1045] sm:$0xff]
  %v1047 = vadd.f32 %v1046, %v1041
  %v1048 = vxor.u32 %v1047, 2147483648
  %v1049 = vmul.f32 %v1048, 1.442695
  %v1050 = vpow.pop %v1049
  %v1051 = vadd.f32 %v1050, 1.0
  %v1052 = vrcp.pop %v1051
  %v1053 = vmul.f32 1.0, %v1052
  %1055 = vrot.lane.b32.xlu0 %v1041, 64
  %v1056 = vpop.permute.xlu0 %1055
  %v1058 = vmul.f32 %v1053, %v1056
  %1060 = vrot.lane.b32.xlu0 %v1058, 64
  %v1061 = vpop.permute.xlu0 %1060
  %v1063 = vadd.f32 %v1046, %v1061
  %v1064 = vtanh.pop %v1063
  %v1065 = vsub.f32 1.0, %v1053
  %1067 = vrot.lane.b32.xlu0 %v1064, 96
  %v1068 = vpop.permute.xlu0 %1067
  %v1070 = vmul.f32 %v1065, %v1068
  %1071 = vrot.lane.b32.xlu0 %v970, 32
  %v1072 = vpop.permute.xlu0 %1071
  %v1074 = vmul.f32 %v1053, %v1072
  %v1075 = vadd.f32 %v1070, %v1074
  %s1076 = scalar_lea.vmem [#allocation3], 24
  %v1077 = vld [vmem:[%s1076] sm:$0xff]
  %1078 = vrot.lane.b32.xlu0 %v1041, 32
  %v1079 = vpop.permute.xlu0 %1078
  %v1081 = vadd.f32 %v1077, %v1079
  %v1082 = vxor.u32 %v1081, 2147483648
  %v1083 = vmul.f32 %v1082, 1.442695
  %v1084 = vpow.pop %v1083
  %v1085 = vadd.f32 %v1084, 1.0
  %v1086 = vrcp.pop %v1085
  %v1087 = vmul.f32 1.0, %v1086
  %1089 = vrot.lane.b32.xlu0 %v1043, 32
  %v1090 = vpop.permute.xlu0 %1089
  %v1092 = vadd.f32 %v1077, %v1090
  %v1093 = vxor.u32 %v1092, 2147483648
  %v1094 = vmul.f32 %v1093, 1.442695
  %v1095 = vpow.pop %v1094
  %v1096 = vadd.f32 %v1095, 1.0
  %v1097 = vrcp.pop %v1096
  %v1098 = vmul.f32 1.0, %v1097
  %1099 = vrot.lane.b32.xlu0 %v1043, 96
  %v1100 = vpop.permute.xlu0 %1099
  %v1102 = vmul.f32 %v1087, %v1100
  %1104 = vrot.lane.b32.xlu0 %v1102, 64
  %v1105 = vpop.permute.xlu0 %1104
  %v1107 = vadd.f32 %v1077, %v1105
  %v1108 = vtanh.pop %v1107
  %v1109 = vsub.f32 1.0, %v1098
  %1111 = vrot.lane.b32.xlu0 %v1108, 96
  %v1112 = vpop.permute.xlu0 %1111
  %v1114 = vmul.f32 %v1109, %v1112
  %v1115 = vmul.f32 %v1098, %v970
  %v1116 = vadd.f32 %v1114, %v1115
  %1118 = vrot.lane.b32.xlu0 %v1075, 96
  %v1119 = vpop.permute.xlu0 %1118
  %s1121 = scalar_lea.vmem [#allocation4], 32
  %1122 = vst.msk [vmem:[%s1121] sm:$0xff] %vm485, %v1119
  %1124 = vrot.lane.b32.xlu0 %v1116, 96
  %v1125 = vpop.permute.xlu0 %1124
  %s1127 = scalar_lea.vmem [#allocation5], 24
  %1128 = vst.msk [vmem:[%s1127] sm:$0xff] %vm485, %v1125
  %v1129 = vsel %vm485, %v1119, %v1116
  %v1131 = vsel %vm338, %v1129, 0
  %1133 = vmatprep.subr.mxu0 %v311
  %1134 = vmatpush1.msra.mxu0 %v310
  %1135 = vmatprep.subr.mxu0 %v313
  %1136 = vmatpush1.msra.mxu0 %v312
  %1137 = vmatprep.subr.mxu0 %v315
  %1138 = vmatpush1.msra.mxu0 %v314
  %1139 = vmatprep.subr.mxu0 %v317
  %1140 = vmatpush1.msra.mxu0 %v316
  %1141 = vmatprep.subr.mxu0 %v319
  %1142 = vmatpush1.msra.mxu0 %v318
  %1143 = vmatprep.subr.mxu0 %v321
  %1144 = vmatpush1.msra.mxu0 %v320
  %1145 = vmatprep.subr.mxu0 %v323
  %1146 = vmatpush1.msra.mxu0 %v322
  %1147 = vmatprep.subr.mxu0 %v325
  %1148 = vmatpush1.msra.mxu0 %v324
  %1149 = vmatprep.subr.mxu0 0.0
  %1150 = vmatpush1.msra.mxu0 0.0
  %1151 = vmatprep.subr.mxu0 0.0
  %1152 = vmatpush1.msra.mxu0 0.0
  %1153 = vmatprep.subr.mxu0 0.0
  %1154 = vmatpush1.msra.mxu0 0.0
  %1155 = vmatprep.subr.mxu0 0.0
  %1156 = vmatpush1.msra.mxu0 0.0
  %1157 = vmatprep.subr.mxu0 0.0
  %1158 = vmatpush1.msra.mxu0 0.0
  %1159 = vmatprep.subr.mxu0 0.0
  %1160 = vmatpush1.msra.mxu0 0.0
  %1161 = vmatprep.subr.mxu0 0.0
  %1162 = vmatpush1.msra.mxu0 0.0
  %1163 = vmatprep.subr.mxu0 0.0
  %1164 = vmatpush1.msra.mxu0 0.0
  %1165 = vmatprep.subr.mxu0 0.0
  %1166 = vmatpush1.msra.mxu0 0.0
  %1167 = vmatprep.subr.mxu0 0.0
  %1168 = vmatpush1.msra.mxu0 0.0
  %1169 = vmatprep.subr.mxu0 0.0
  %1170 = vmatpush1.msra.mxu0 0.0
  %1171 = vmatprep.subr.mxu0 0.0
  %1172 = vmatpush1.msra.mxu0 0.0
  %1173 = vmatprep.subr.mxu0 0.0
  %1174 = vmatpush1.msra.mxu0 0.0
  %1175 = vmatprep.subr.mxu0 0.0
  %1176 = vmatpush1.msra.mxu0 0.0
  %1177 = vmatprep.subr.mxu0 0.0
  %1178 = vmatpush1.msra.mxu0 0.0
  %1179 = vmatprep.subr.mxu0 0.0
  %1180 = vmatpush1.msra.mxu0 0.0
  %1181 = vmatprep.subr.mxu0 0.0
  %1182 = vmatpush1.msra.mxu0 0.0
  %1183 = vmatprep.subr.mxu0 0.0
  %1184 = vmatpush1.msra.mxu0 0.0
  %1185 = vmatprep.subr.mxu0 0.0
  %1186 = vmatpush1.msra.mxu0 0.0
  %1187 = vmatprep.subr.mxu0 0.0
  %1188 = vmatpush1.msra.mxu0 0.0
  %1189 = vmatprep.subr.mxu0 0.0
  %1190 = vmatpush1.msra.mxu0 0.0
  %1191 = vmatprep.subr.mxu0 0.0
  %1192 = vmatpush1.msra.mxu0 0.0
  %1193 = vmatprep.subr.mxu0 0.0
  %1194 = vmatpush1.msra.mxu0 0.0
  %1195 = vmatprep.subr.mxu0 0.0
  %1196 = vmatpush1.msra.mxu0 0.0
  %1197 = vmatprep.mubr.f32.mxu0 0.0
  %1198 = vmatmul.mubr.f32.gmra.mrb[0].mxu0 %v1131
  %v1199 = vpop.f32.mrb[0].mxu0
  %v1200 = vadd.f32 %v331, %v1199
  %v1201 = vpop.f32.mrb[0].mxu0
  %v1202 = vadd.f32 %v335, %v1201
  %1203 = vdwg.mxu0
  %s1204 = scalar_lea.vmem [#allocation2], 40
  %v1205 = vld [vmem:[%s1204] sm:$0xff]
  %v1206 = vadd.f32 %v1205, %v1200
  %v1207 = vxor.u32 %v1206, 2147483648
  %v1208 = vmul.f32 %v1207, 1.442695
  %v1209 = vpow.pop %v1208
  %v1210 = vadd.f32 %v1209, 1.0
  %v1211 = vrcp.pop %v1210
  %v1212 = vmul.f32 1.0, %v1211
  %1214 = vrot.lane.b32.xlu0 %v1200, 64
  %v1215 = vpop.permute.xlu0 %1214
  %v1217 = vmul.f32 %v1212, %v1215
  %1219 = vrot.lane.b32.xlu0 %v1217, 64
  %v1220 = vpop.permute.xlu0 %1219
  %v1222 = vadd.f32 %v1205, %v1220
  %v1223 = vtanh.pop %v1222
  %v1224 = vsub.f32 1.0, %v1212
  %1226 = vrot.lane.b32.xlu0 %v1223, 96
  %v1227 = vpop.permute.xlu0 %1226
  %v1229 = vmul.f32 %v1224, %v1227
  %1230 = vrot.lane.b32.xlu0 %v1129, 32
  %v1231 = vpop.permute.xlu0 %1230
  %v1233 = vmul.f32 %v1212, %v1231
  %v1234 = vadd.f32 %v1229, %v1233
  %s1235 = scalar_lea.vmem [#allocation3], 16
  %v1236 = vld [vmem:[%s1235] sm:$0xff]
  %1237 = vrot.lane.b32.xlu0 %v1200, 32
  %v1238 = vpop.permute.xlu0 %1237
  %v1240 = vadd.f32 %v1236, %v1238
  %v1241 = vxor.u32 %v1240, 2147483648
  %v1242 = vmul.f32 %v1241, 1.442695
  %v1243 = vpow.pop %v1242
  %v1244 = vadd.f32 %v1243, 1.0
  %v1245 = vrcp.pop %v1244
  %v1246 = vmul.f32 1.0, %v1245
  %1248 = vrot.lane.b32.xlu0 %v1202, 32
  %v1249 = vpop.permute.xlu0 %1248
  %v1251 = vadd.f32 %v1236, %v1249
  %v1252 = vxor.u32 %v1251, 2147483648
  %v1253 = vmul.f32 %v1252, 1.442695
  %v1254 = vpow.pop %v1253
  %v1255 = vadd.f32 %v1254, 1.0
  %v1256 = vrcp.pop %v1255
  %v1257 = vmul.f32 1.0, %v1256
  %1258 = vrot.lane.b32.xlu0 %v1202, 96
  %v1259 = vpop.permute.xlu0 %1258
  %v1261 = vmul.f32 %v1246, %v1259
  %1263 = vrot.lane.b32.xlu0 %v1261, 64
  %v1264 = vpop.permute.xlu0 %1263
  %v1266 = vadd.f32 %v1236, %v1264
  %v1267 = vtanh.pop %v1266
  %v1268 = vsub.f32 1.0, %v1257
  %1270 = vrot.lane.b32.xlu0 %v1267, 96
  %v1271 = vpop.permute.xlu0 %1270
  %v1273 = vmul.f32 %v1268, %v1271
  %v1274 = vmul.f32 %v1257, %v1129
  %v1275 = vadd.f32 %v1273, %v1274
  %1277 = vrot.lane.b32.xlu0 %v1234, 96
  %v1278 = vpop.permute.xlu0 %1277
  %s1280 = scalar_lea.vmem [#allocation4], 40
  %1281 = vst.msk [vmem:[%s1280] sm:$0xff] %vm485, %v1278
  %1283 = vrot.lane.b32.xlu0 %v1275, 96
  %v1284 = vpop.permute.xlu0 %1283
  %s1286 = scalar_lea.vmem [#allocation5], 16
  %1287 = vst.msk [vmem:[%s1286] sm:$0xff] %vm485, %v1284
  %v1288 = vsel %vm485, %v1278, %v1275
  %v1290 = vsel %vm338, %v1288, 0
  %1292 = vmatprep.subr.mxu0 %v311
  %1293 = vmatpush1.msra.mxu0 %v310
  %1294 = vmatprep.subr.mxu0 %v313
  %1295 = vmatpush1.msra.mxu0 %v312
  %1296 = vmatprep.subr.mxu0 %v315
  %1297 = vmatpush1.msra.mxu0 %v314
  %1298 = vmatprep.subr.mxu0 %v317
  %1299 = vmatpush1.msra.mxu0 %v316
  %1300 = vmatprep.subr.mxu0 %v319
  %1301 = vmatpush1.msra.mxu0 %v318
  %1302 = vmatprep.subr.mxu0 %v321
  %1303 = vmatpush1.msra.mxu0 %v320
  %1304 = vmatprep.subr.mxu0 %v323
  %1305 = vmatpush1.msra.mxu0 %v322
  %1306 = vmatprep.subr.mxu0 %v325
  %1307 = vmatpush1.msra.mxu0 %v324
  %1308 = vmatprep.subr.mxu0 0.0
  %1309 = vmatpush1.msra.mxu0 0.0
  %1310 = vmatprep.subr.mxu0 0.0
  %1311 = vmatpush1.msra.mxu0 0.0
  %1312 = vmatprep.subr.mxu0 0.0
  %1313 = vmatpush1.msra.mxu0 0.0
  %1314 = vmatprep.subr.mxu0 0.0
  %1315 = vmatpush1.msra.mxu0 0.0
  %1316 = vmatprep.subr.mxu0 0.0
  %1317 = vmatpush1.msra.mxu0 0.0
  %1318 = vmatprep.subr.mxu0 0.0
  %1319 = vmatpush1.msra.mxu0 0.0
  %1320 = vmatprep.subr.mxu0 0.0
  %1321 = vmatpush1.msra.mxu0 0.0
  %1322 = vmatprep.subr.mxu0 0.0
  %1323 = vmatpush1.msra.mxu0 0.0
  %1324 = vmatprep.subr.mxu0 0.0
  %1325 = vmatpush1.msra.mxu0 0.0
  %1326 = vmatprep.subr.mxu0 0.0
  %1327 = vmatpush1.msra.mxu0 0.0
  %1328 = vmatprep.subr.mxu0 0.0
  %1329 = vmatpush1.msra.mxu0 0.0
  %1330 = vmatprep.subr.mxu0 0.0
  %1331 = vmatpush1.msra.mxu0 0.0
  %1332 = vmatprep.subr.mxu0 0.0
  %1333 = vmatpush1.msra.mxu0 0.0
  %1334 = vmatprep.subr.mxu0 0.0
  %1335 = vmatpush1.msra.mxu0 0.0
  %1336 = vmatprep.subr.mxu0 0.0
  %1337 = vmatpush1.msra.mxu0 0.0
  %1338 = vmatprep.subr.mxu0 0.0
  %1339 = vmatpush1.msra.mxu0 0.0
  %1340 = vmatprep.subr.mxu0 0.0
  %1341 = vmatpush1.msra.mxu0 0.0
  %1342 = vmatprep.subr.mxu0 0.0
  %1343 = vmatpush1.msra.mxu0 0.0
  %1344 = vmatprep.subr.mxu0 0.0
  %1345 = vmatpush1.msra.mxu0 0.0
  %1346 = vmatprep.subr.mxu0 0.0
  %1347 = vmatpush1.msra.mxu0 0.0
  %1348 = vmatprep.subr.mxu0 0.0
  %1349 = vmatpush1.msra.mxu0 0.0
  %1350 = vmatprep.subr.mxu0 0.0
  %1351 = vmatpush1.msra.mxu0 0.0
  %1352 = vmatprep.subr.mxu0 0.0
  %1353 = vmatpush1.msra.mxu0 0.0
  %1354 = vmatprep.subr.mxu0 0.0
  %1355 = vmatpush1.msra.mxu0 0.0
  %1356 = vmatprep.mubr.f32.mxu0 0.0
  %1357 = vmatmul.mubr.f32.gmra.mrb[0].mxu0 %v1290
  %v1358 = vpop.f32.mrb[0].mxu0
  %v1359 = vadd.f32 %v331, %v1358
  %v1360 = vpop.f32.mrb[0].mxu0
  %v1361 = vadd.f32 %v335, %v1360
  %1362 = vdwg.mxu0
  %s1363 = scalar_lea.vmem [#allocation2], 48
  %v1364 = vld [vmem:[%s1363] sm:$0xff]
  %v1365 = vadd.f32 %v1364, %v1359
  %v1366 = vxor.u32 %v1365, 2147483648
  %v1367 = vmul.f32 %v1366, 1.442695
  %v1368 = vpow.pop %v1367
  %v1369 = vadd.f32 %v1368, 1.0
  %v1370 = vrcp.pop %v1369
  %v1371 = vmul.f32 1.0, %v1370
  %1373 = vrot.lane.b32.xlu0 %v1359, 64
  %v1374 = vpop.permute.xlu0 %1373
  %v1376 = vmul.f32 %v1371, %v1374
  %1378 = vrot.lane.b32.xlu0 %v1376, 64
  %v1379 = vpop.permute.xlu0 %1378
  %v1381 = vadd.f32 %v1364, %v1379
  %v1382 = vtanh.pop %v1381
  %v1383 = vsub.f32 1.0, %v1371
  %1385 = vrot.lane.b32.xlu0 %v1382, 96
  %v1386 = vpop.permute.xlu0 %1385
  %v1388 = vmul.f32 %v1383, %v1386
  %1389 = vrot.lane.b32.xlu0 %v1288, 32
  %v1390 = vpop.permute.xlu0 %1389
  %v1392 = vmul.f32 %v1371, %v1390
  %v1393 = vadd.f32 %v1388, %v1392
  %s1394 = scalar_lea.vmem [#allocation3], 8
  %v1395 = vld [vmem:[%s1394] sm:$0xff]
  %1396 = vrot.lane.b32.xlu0 %v1359, 32
  %v1397 = vpop.permute.xlu0 %1396
  %v1399 = vadd.f32 %v1395, %v1397
  %v1400 = vxor.u32 %v1399, 2147483648
  %v1401 = vmul.f32 %v1400, 1.442695
  %v1402 = vpow.pop %v1401
  %v1403 = vadd.f32 %v1402, 1.0
  %v1404 = vrcp.pop %v1403
  %v1405 = vmul.f32 1.0, %v1404
  %1407 = vrot.lane.b32.xlu0 %v1361, 32
  %v1408 = vpop.permute.xlu0 %1407
  %v1410 = vadd.f32 %v1395, %v1408
  %v1411 = vxor.u32 %v1410, 2147483648
  %v1412 = vmul.f32 %v1411, 1.442695
  %v1413 = vpow.pop %v1412
  %v1414 = vadd.f32 %v1413, 1.0
  %v1415 = vrcp.pop %v1414
  %v1416 = vmul.f32 1.0, %v1415
  %1417 = vrot.lane.b32.xlu0 %v1361, 96
  %v1418 = vpop.permute.xlu0 %1417
  %v1420 = vmul.f32 %v1405, %v1418
  %1422 = vrot.lane.b32.xlu0 %v1420, 64
  %v1423 = vpop.permute.xlu0 %1422
  %v1425 = vadd.f32 %v1395, %v1423
  %v1426 = vtanh.pop %v1425
  %v1427 = vsub.f32 1.0, %v1416
  %1429 = vrot.lane.b32.xlu0 %v1426, 96
  %v1430 = vpop.permute.xlu0 %1429
  %v1432 = vmul.f32 %v1427, %v1430
  %v1433 = vmul.f32 %v1416, %v1288
  %v1434 = vadd.f32 %v1432, %v1433
  %1436 = vrot.lane.b32.xlu0 %v1393, 96
  %v1437 = vpop.permute.xlu0 %1436
  %s1439 = scalar_lea.vmem [#allocation4], 48
  %1440 = vst.msk [vmem:[%s1439] sm:$0xff] %vm485, %v1437
  %1442 = vrot.lane.b32.xlu0 %v1434, 96
  %v1443 = vpop.permute.xlu0 %1442
  %s1445 = scalar_lea.vmem [#allocation5], 8
  %1446 = vst.msk [vmem:[%s1445] sm:$0xff] %vm485, %v1443
  %v1447 = vsel %vm485, %v1437, %v1434
  %v1449 = vsel %vm338, %v1447, 0
  %1451 = vmatprep.subr.mxu0 %v311
  %1452 = vmatpush1.msra.mxu0 %v310
  %1453 = vmatprep.subr.mxu0 %v313
  %1454 = vmatpush1.msra.mxu0 %v312
  %1455 = vmatprep.subr.mxu0 %v315
  %1456 = vmatpush1.msra.mxu0 %v314
  %1457 = vmatprep.subr.mxu0 %v317
  %1458 = vmatpush1.msra.mxu0 %v316
  %1459 = vmatprep.subr.mxu0 %v319
  %1460 = vmatpush1.msra.mxu0 %v318
  %1461 = vmatprep.subr.mxu0 %v321
  %1462 = vmatpush1.msra.mxu0 %v320
  %1463 = vmatprep.subr.mxu0 %v323
  %1464 = vmatpush1.msra.mxu0 %v322
  %1465 = vmatprep.subr.mxu0 %v325
  %1466 = vmatpush1.msra.mxu0 %v324
  %1467 = vmatprep.subr.mxu0 0.0
  %1468 = vmatpush1.msra.mxu0 0.0
  %1469 = vmatprep.subr.mxu0 0.0
  %1470 = vmatpush1.msra.mxu0 0.0
  %1471 = vmatprep.subr.mxu0 0.0
  %1472 = vmatpush1.msra.mxu0 0.0
  %1473 = vmatprep.subr.mxu0 0.0
  %1474 = vmatpush1.msra.mxu0 0.0
  %1475 = vmatprep.subr.mxu0 0.0
  %1476 = vmatpush1.msra.mxu0 0.0
  %1477 = vmatprep.subr.mxu0 0.0
  %1478 = vmatpush1.msra.mxu0 0.0
  %1479 = vmatprep.subr.mxu0 0.0
  %1480 = vmatpush1.msra.mxu0 0.0
  %1481 = vmatprep.subr.mxu0 0.0
  %1482 = vmatpush1.msra.mxu0 0.0
  %1483 = vmatprep.subr.mxu0 0.0
  %1484 = vmatpush1.msra.mxu0 0.0
  %1485 = vmatprep.subr.mxu0 0.0
  %1486 = vmatpush1.msra.mxu0 0.0
  %1487 = vmatprep.subr.mxu0 0.0
  %1488 = vmatpush1.msra.mxu0 0.0
  %1489 = vmatprep.subr.mxu0 0.0
  %1490 = vmatpush1.msra.mxu0 0.0
  %1491 = vmatprep.subr.mxu0 0.0
  %1492 = vmatpush1.msra.mxu0 0.0
  %1493 = vmatprep.subr.mxu0 0.0
  %1494 = vmatpush1.msra.mxu0 0.0
  %1495 = vmatprep.subr.mxu0 0.0
  %1496 = vmatpush1.msra.mxu0 0.0
  %1497 = vmatprep.subr.mxu0 0.0
  %1498 = vmatpush1.msra.mxu0 0.0
  %1499 = vmatprep.subr.mxu0 0.0
  %1500 = vmatpush1.msra.mxu0 0.0
  %1501 = vmatprep.subr.mxu0 0.0
  %1502 = vmatpush1.msra.mxu0 0.0
  %1503 = vmatprep.subr.mxu0 0.0
  %1504 = vmatpush1.msra.mxu0 0.0
  %1505 = vmatprep.subr.mxu0 0.0
  %1506 = vmatpush1.msra.mxu0 0.0
  %1507 = vmatprep.subr.mxu0 0.0
  %1508 = vmatpush1.msra.mxu0 0.0
  %1509 = vmatprep.subr.mxu0 0.0
  %1510 = vmatpush1.msra.mxu0 0.0
  %1511 = vmatprep.subr.mxu0 0.0
  %1512 = vmatpush1.msra.mxu0 0.0
  %1513 = vmatprep.subr.mxu0 0.0
  %1514 = vmatpush1.msra.mxu0 0.0
  %1515 = vmatprep.mubr.f32.mxu0 0.0
  %1516 = vmatmul.mubr.f32.gmra.mrb[0].mxu0 %v1449
  %v1517 = vpop.f32.mrb[0].mxu0
  %v1518 = vadd.f32 %v331, %v1517
  %v1519 = vpop.f32.mrb[0].mxu0
  %v1520 = vadd.f32 %v335, %v1519
  %1521 = vdwg.mxu0
  %s1522 = scalar_lea.vmem [#allocation2], 56
  %v1523 = vld [vmem:[%s1522] sm:$0xff]
  %v1524 = vadd.f32 %v1523, %v1518
  %v1525 = vxor.u32 %v1524, 2147483648
  %v1526 = vmul.f32 %v1525, 1.442695
  %v1527 = vpow.pop %v1526
  %v1528 = vadd.f32 %v1527, 1.0
  %v1529 = vrcp.pop %v1528
  %v1530 = vmul.f32 1.0, %v1529
  %1532 = vrot.lane.b32.xlu0 %v1518, 64
  %v1533 = vpop.permute.xlu0 %1532
  %v1535 = vmul.f32 %v1530, %v1533
  %1537 = vrot.lane.b32.xlu0 %v1535, 64
  %v1538 = vpop.permute.xlu0 %1537
  %v1540 = vadd.f32 %v1523, %v1538
  %v1541 = vtanh.pop %v1540
  %v1542 = vsub.f32 1.0, %v1530
  %1544 = vrot.lane.b32.xlu0 %v1541, 96
  %v1545 = vpop.permute.xlu0 %1544
  %v1547 = vmul.f32 %v1542, %v1545
  %1548 = vrot.lane.b32.xlu0 %v1447, 32
  %v1549 = vpop.permute.xlu0 %1548
  %v1551 = vmul.f32 %v1530, %v1549
  %v1552 = vadd.f32 %v1547, %v1551
  %v1553 = vld [vmem:[#allocation3] sm:$0xff]
  %1554 = vrot.lane.b32.xlu0 %v1518, 32
  %v1555 = vpop.permute.xlu0 %1554
  %v1557 = vadd.f32 %v1553, %v1555
  %v1558 = vxor.u32 %v1557, 2147483648
  %v1559 = vmul.f32 %v1558, 1.442695
  %v1560 = vpow.pop %v1559
  %v1561 = vadd.f32 %v1560, 1.0
  %v1562 = vrcp.pop %v1561
  %v1563 = vmul.f32 1.0, %v1562
  %1565 = vrot.lane.b32.xlu0 %v1520, 32
  %v1566 = vpop.permute.xlu0 %1565
  %v1568 = vadd.f32 %v1553, %v1566
  %v1569 = vxor.u32 %v1568, 2147483648
  %v1570 = vmul.f32 %v1569, 1.442695
  %v1571 = vpow.pop %v1570
  %v1572 = vadd.f32 %v1571, 1.0
  %v1573 = vrcp.pop %v1572
  %v1574 = vmul.f32 1.0, %v1573
  %1575 = vrot.lane.b32.xlu0 %v1520, 96
  %v1576 = vpop.permute.xlu0 %1575
  %v1578 = vmul.f32 %v1563, %v1576
  %1580 = vrot.lane.b32.xlu0 %v1578, 64
  %v1581 = vpop.permute.xlu0 %1580
  %v1583 = vadd.f32 %v1553, %v1581
  %v1584 = vtanh.pop %v1583
  %v1585 = vsub.f32 1.0, %v1574
  %1587 = vrot.lane.b32.xlu0 %v1584, 96
  %v1588 = vpop.permute.xlu0 %1587
  %v1590 = vmul.f32 %v1585, %v1588
  %v1591 = vmul.f32 %v1574, %v1447
  %v1592 = vadd.f32 %v1590, %v1591
  %1594 = vrot.lane.b32.xlu0 %v1552, 96
  %v1595 = vpop.permute.xlu0 %1594
  %s1597 = scalar_lea.vmem [#allocation4], 56
  %1598 = vst.msk [vmem:[%s1597] sm:$0xff] %vm485, %v1595
  %1600 = vrot.lane.b32.xlu0 %v1592, 96
  %v1601 = vpop.permute.xlu0 %1600
  %1603 = vst.msk [vmem:[#allocation5] sm:$0xff] %vm485, %v1601
  %v1604 = vld [vmem:[%s7] sm:$0xff]
  %v1605 = vld [vmem:[%s7 + $0x8] sm:$0xff]
  %v1606 = vld [vmem:[%s7 + $0x10] sm:$0xff]
  %v1607 = vld [vmem:[%s7 + $0x18] sm:$0xff]
  %v1608 = vld [vmem:[%s7 + $0x20] sm:$0xff]
  %v1609 = vld [vmem:[%s7 + $0x28] sm:$0xff]
  %v1610 = vld [vmem:[%s7 + $0x30] sm:$0xff]
  %v1611 = vld [vmem:[%s7 + $0x38] sm:$0xff]
  %v1612 = vld [vmem:[#allocation4] sm:$0xff]
  %v1613 = vld [vmem:[#allocation4 + $0x8] sm:$0xff]
  %v1614 = vld [vmem:[#allocation4 + $0x10] sm:$0xff]
  %v1615 = vld [vmem:[#allocation4 + $0x18] sm:$0xff]
  %v1616 = vld [vmem:[#allocation4 + $0x20] sm:$0xff]
  %v1617 = vld [vmem:[#allocation4 + $0x28] sm:$0xff]
  %v1618 = vld [vmem:[#allocation4 + $0x30] sm:$0xff]
  %v1619 = vld [vmem:[#allocation4 + $0x38] sm:$0xff]
  %v1620 = vld [vmem:[#allocation5] sm:$0xff]
  %v1621 = vld [vmem:[#allocation5 + $0x8] sm:$0xff]
  %v1622 = vld [vmem:[#allocation5 + $0x10] sm:$0xff]
  %v1623 = vld [vmem:[#allocation5 + $0x18] sm:$0xff]
  %v1624 = vld [vmem:[#allocation5 + $0x20] sm:$0xff]
  %v1625 = vld [vmem:[#allocation5 + $0x28] sm:$0xff]
  %v1626 = vld [vmem:[#allocation5 + $0x30] sm:$0xff]
  %v1627 = vld [vmem:[#allocation5 + $0x38] sm:$0xff]
  %v1629 = vsel %vm485, %v1620, 0
  %v1632 = vsel %vm485, %v1621, 0
  %v1635 = vsel %vm485, %v1622, 0
  %v1638 = vsel %vm485, %v1623, 0
  %v1641 = vsel %vm485, %v1624, 0
  %v1644 = vsel %vm485, %v1625, 0
  %v1647 = vsel %vm485, %v1626, 0
  %v1650 = vsel %vm485, %v1627, 0
  %1652 = vmatprep.subr.mxu0 0.0
  %1653 = vmatpush1.msra.mxu0 %v1608
  %1654 = vmatprep.subr.mxu0 0.0
  %1655 = vmatpush1.msra.mxu0 %v1609
  %1656 = vmatprep.subr.mxu0 0.0
  %1657 = vmatpush1.msra.mxu0 %v1610
  %1658 = vmatprep.subr.mxu0 0.0
  %1659 = vmatpush1.msra.mxu0 %v1611
  %1660 = vmatprep.subr.mxu0 0.0
  %1661 = vmatpush1.msra.mxu0 0.0
  %1662 = vmatprep.subr.mxu0 0.0
  %1663 = vmatpush1.msra.mxu0 0.0
  %1664 = vmatprep.subr.mxu0 0.0
  %1665 = vmatpush1.msra.mxu0 0.0
  %1666 = vmatprep.subr.mxu0 0.0
  %1667 = vmatpush1.msra.mxu0 0.0
  %1668 = vmatprep.subr.mxu0 0.0
  %1669 = vmatpush1.msra.mxu0 0.0
  %1670 = vmatprep.subr.mxu0 0.0
  %1671 = vmatpush1.msra.mxu0 0.0
  %1672 = vmatprep.subr.mxu0 0.0
  %1673 = vmatpush1.msra.mxu0 0.0
  %1674 = vmatprep.subr.mxu0 0.0
  %1675 = vmatpush1.msra.mxu0 0.0
  %1676 = vmatprep.subr.mxu0 0.0
  %1677 = vmatpush1.msra.mxu0 0.0
  %1678 = vmatprep.subr.mxu0 0.0
  %1679 = vmatpush1.msra.mxu0 0.0
  %1680 = vmatprep.subr.mxu0 0.0
  %1681 = vmatpush1.msra.mxu0 0.0
  %1682 = vmatprep.subr.mxu0 0.0
  %1683 = vmatpush1.msra.mxu0 0.0
  %1684 = vmatprep.subr.mxu0 0.0
  %1685 = vmatpush1.msra.mxu0 0.0
  %1686 = vmatprep.subr.mxu0 0.0
  %1687 = vmatpush1.msra.mxu0 0.0
  %1688 = vmatprep.subr.mxu0 0.0
  %1689 = vmatpush1.msra.mxu0 0.0
  %1690 = vmatprep.subr.mxu0 0.0
  %1691 = vmatpush1.msra.mxu0 0.0
  %1692 = vmatprep.subr.mxu0 0.0
  %1693 = vmatpush1.msra.mxu0 0.0
  %1694 = vmatprep.subr.mxu0 0.0
  %1695 = vmatpush1.msra.mxu0 0.0
  %1696 = vmatprep.subr.mxu0 0.0
  %1697 = vmatpush1.msra.mxu0 0.0
  %1698 = vmatprep.subr.mxu0 0.0
  %1699 = vmatpush1.msra.mxu0 0.0
  %1700 = vmatprep.subr.mxu0 0.0
  %1701 = vmatpush1.msra.mxu0 0.0
  %1702 = vmatprep.subr.mxu0 0.0
  %1703 = vmatpush1.msra.mxu0 0.0
  %1704 = vmatprep.subr.mxu0 0.0
  %1705 = vmatpush1.msra.mxu0 0.0
  %1706 = vmatprep.subr.mxu0 0.0
  %1707 = vmatpush1.msra.mxu0 0.0
  %1708 = vmatprep.subr.mxu0 0.0
  %1709 = vmatpush1.msra.mxu0 0.0
  %1710 = vmatprep.subr.mxu0 0.0
  %1711 = vmatpush1.msra.mxu0 0.0
  %1712 = vmatprep.subr.mxu0 0.0
  %1713 = vmatpush1.msra.mxu0 0.0
  %1714 = vmatprep.subr.mxu0 0.0
  %1715 = vmatpush1.msra.mxu0 0.0
  %1716 = vmatprep.mubr.f32.mxu0 0.0
  %1717 = vmatmul.mubr.f32.gmra.mrb[0].mxu0 %v1629
  %v1718 = vpop.f32.mrb[0].mxu0
  %v1719 = vadd.f32 0.0, %v1718
  %v1720 = vpop.f32.mrb[0].mxu0
  %1721 = vmatprep.mubr.f32.mxu0 0.0
  %1722 = vmatmul.mubr.f32.gmra.mrb[0].mxu0 %v1632
  %v1723 = vpop.f32.mrb[0].mxu0
  %v1724 = vadd.f32 0.0, %v1723
  %v1725 = vpop.f32.mrb[0].mxu0
  %1726 = vmatprep.mubr.f32.mxu0 0.0
  %1727 = vmatmul.mubr.f32.gmra.mrb[0].mxu0 %v1635
  %v1728 = vpop.f32.mrb[0].mxu0
  %v1729 = vadd.f32 0.0, %v1728
  %v1730 = vpop.f32.mrb[0].mxu0
  %1731 = vmatprep.mubr.f32.mxu0 0.0
  %1732 = vmatmul.mubr.f32.gmra.mrb[0].mxu0 %v1638
  %v1733 = vpop.f32.mrb[0].mxu0
  %v1734 = vadd.f32 0.0, %v1733
  %v1735 = vpop.f32.mrb[0].mxu0
  %1736 = vmatprep.mubr.f32.mxu0 0.0
  %1737 = vmatmul.mubr.f32.gmra.mrb[0].mxu0 %v1641
  %v1738 = vpop.f32.mrb[0].mxu0
  %v1739 = vadd.f32 0.0, %v1738
  %v1740 = vpop.f32.mrb[0].mxu0
  %1741 = vmatprep.mubr.f32.mxu0 0.0
  %1742 = vmatmul.mubr.f32.gmra.mrb[0].mxu0 %v1644
  %v1743 = vpop.f32.mrb[0].mxu0
  %v1744 = vadd.f32 0.0, %v1743
  %v1745 = vpop.f32.mrb[0].mxu0
  %1746 = vmatprep.mubr.f32.mxu0 0.0
  %1747 = vmatmul.mubr.f32.gmra.mrb[0].mxu0 %v1647
  %v1748 = vpop.f32.mrb[0].mxu0
  %v1749 = vadd.f32 0.0, %v1748
  %v1750 = vpop.f32.mrb[0].mxu0
  %1751 = vmatprep.mubr.f32.mxu0 0.0
  %1752 = vmatmul.mubr.f32.gmra.mrb[0].mxu0 %v1650
  %v1753 = vpop.f32.mrb[0].mxu0
  %v1754 = vadd.f32 0.0, %v1753
  %v1755 = vpop.f32.mrb[0].mxu0
  %1756 = vdwg.mxu0
  %v1758 = vsel %vm485, %v1612, 0
  %v1761 = vsel %vm485, %v1613, 0
  %v1764 = vsel %vm485, %v1614, 0
  %v1767 = vsel %vm485, %v1615, 0
  %v1770 = vsel %vm485, %v1616, 0
  %v1773 = vsel %vm485, %v1617, 0
  %v1776 = vsel %vm485, %v1618, 0
  %v1779 = vsel %vm485, %v1619, 0
  %1781 = vmatprep.subr.mxu0 0.0
  %1782 = vmatpush1.msra.mxu0 %v1604
  %1783 = vmatprep.subr.mxu0 0.0
  %1784 = vmatpush1.msra.mxu0 %v1605
  %1785 = vmatprep.subr.mxu0 0.0
  %1786 = vmatpush1.msra.mxu0 %v1606
  %1787 = vmatprep.subr.mxu0 0.0
  %1788 = vmatpush1.msra.mxu0 %v1607
  %1789 = vmatprep.subr.mxu0 0.0
  %1790 = vmatpush1.msra.mxu0 0.0
  %1791 = vmatprep.subr.mxu0 0.0
  %1792 = vmatpush1.msra.mxu0 0.0
  %1793 = vmatprep.subr.mxu0 0.0
  %1794 = vmatpush1.msra.mxu0 0.0
  %1795 = vmatprep.subr.mxu0 0.0
  %1796 = vmatpush1.msra.mxu0 0.0
  %1797 = vmatprep.subr.mxu0 0.0
  %1798 = vmatpush1.msra.mxu0 0.0
  %1799 = vmatprep.subr.mxu0 0.0
  %1800 = vmatpush1.msra.mxu0 0.0
  %1801 = vmatprep.subr.mxu0 0.0
  %1802 = vmatpush1.msra.mxu0 0.0
  %1803 = vmatprep.subr.mxu0 0.0
  %1804 = vmatpush1.msra.mxu0 0.0
  %1805 = vmatprep.subr.mxu0 0.0
  %1806 = vmatpush1.msra.mxu0 0.0
  %1807 = vmatprep.subr.mxu0 0.0
  %1808 = vmatpush1.msra.mxu0 0.0
  %1809 = vmatprep.subr.mxu0 0.0
  %1810 = vmatpush1.msra.mxu0 0.0
  %1811 = vmatprep.subr.mxu0 0.0
  %1812 = vmatpush1.msra.mxu0 0.0
  %1813 = vmatprep.subr.mxu0 0.0
  %1814 = vmatpush1.msra.mxu0 0.0
  %1815 = vmatprep.subr.mxu0 0.0
  %1816 = vmatpush1.msra.mxu0 0.0
  %1817 = vmatprep.subr.mxu0 0.0
  %1818 = vmatpush1.msra.mxu0 0.0
  %1819 = vmatprep.subr.mxu0 0.0
  %1820 = vmatpush1.msra.mxu0 0.0
  %1821 = vmatprep.subr.mxu0 0.0
  %1822 = vmatpush1.msra.mxu0 0.0
  %1823 = vmatprep.subr.mxu0 0.0
  %1824 = vmatpush1.msra.mxu0 0.0
  %1825 = vmatprep.subr.mxu0 0.0
  %1826 = vmatpush1.msra.mxu0 0.0
  %1827 = vmatprep.subr.mxu0 0.0
  %1828 = vmatpush1.msra.mxu0 0.0
  %1829 = vmatprep.subr.mxu0 0.0
  %1830 = vmatpush1.msra.mxu0 0.0
  %1831 = vmatprep.subr.mxu0 0.0
  %1832 = vmatpush1.msra.mxu0 0.0
  %1833 = vmatprep.subr.mxu0 0.0
  %1834 = vmatpush1.msra.mxu0 0.0
  %1835 = vmatprep.subr.mxu0 0.0
  %1836 = vmatpush1.msra.mxu0 0.0
  %1837 = vmatprep.subr.mxu0 0.0
  %1838 = vmatpush1.msra.mxu0 0.0
  %1839 = vmatprep.subr.mxu0 0.0
  %1840 = vmatpush1.msra.mxu0 0.0
  %1841 = vmatprep.subr.mxu0 0.0
  %1842 = vmatpush1.msra.mxu0 0.0
  %1843 = vmatprep.subr.mxu0 0.0
  %1844 = vmatpush1.msra.mxu0 0.0
  %1845 = vmatprep.mubr.f32.mxu0 0.0
  %1846 = vmatmul.mubr.f32.gmra.mrb[0].mxu0 %v1758
  %v1847 = vpop.f32.mrb[0].mxu0
  %v1848 = vadd.f32 %v1719, %v1847
  %v1849 = vpop.f32.mrb[0].mxu0
  %1850 = vmatprep.mubr.f32.mxu0 0.0
  %1851 = vmatmul.mubr.f32.gmra.mrb[0].mxu0 %v1761
  %v1852 = vpop.f32.mrb[0].mxu0
  %v1853 = vadd.f32 %v1724, %v1852
  %v1854 = vpop.f32.mrb[0].mxu0
  %1855 = vmatprep.mubr.f32.mxu0 0.0
  %1856 = vmatmul.mubr.f32.gmra.mrb[0].mxu0 %v1764
  %v1857 = vpop.f32.mrb[0].mxu0
  %v1858 = vadd.f32 %v1729, %v1857
  %v1859 = vpop.f32.mrb[0].mxu0
  %1860 = vmatprep.mubr.f32.mxu0 0.0
  %1861 = vmatmul.mubr.f32.gmra.mrb[0].mxu0 %v1767
  %v1862 = vpop.f32.mrb[0].mxu0
  %v1863 = vadd.f32 %v1734, %v1862
  %v1864 = vpop.f32.mrb[0].mxu0
  %1865 = vmatprep.mubr.f32.mxu0 0.0
  %1866 = vmatmul.mubr.f32.gmra.mrb[0].mxu0 %v1770
  %v1867 = vpop.f32.mrb[0].mxu0
  %v1868 = vadd.f32 %v1739, %v1867
  %v1869 = vpop.f32.mrb[0].mxu0
  %1870 = vmatprep.mubr.f32.mxu0 0.0
  %1871 = vmatmul.mubr.f32.gmra.mrb[0].mxu0 %v1773
  %v1872 = vpop.f32.mrb[0].mxu0
  %v1873 = vadd.f32 %v1744, %v1872
  %v1874 = vpop.f32.mrb[0].mxu0
  %1875 = vmatprep.mubr.f32.mxu0 0.0
  %1876 = vmatmul.mubr.f32.gmra.mrb[0].mxu0 %v1776
  %v1877 = vpop.f32.mrb[0].mxu0
  %v1878 = vadd.f32 %v1749, %v1877
  %v1879 = vpop.f32.mrb[0].mxu0
  %1880 = vmatprep.mubr.f32.mxu0 0.0
  %1881 = vmatmul.mubr.f32.gmra.mrb[0].mxu0 %v1779
  %v1882 = vpop.f32.mrb[0].mxu0
  %v1883 = vadd.f32 %v1754, %v1882
  %v1884 = vpop.f32.mrb[0].mxu0
  %1885 = vdwg.mxu0
  %v1886 = vld [vmem:[%s8] sm:$0x1]
  %v1888 = vlaneseq
  %v1889 = vshrl.u32 %v1888, 7
  %v1890 = vsub.s32 0, %v1889
  %v1891 = vrot.slane %v1886, %v1890
  %v1893 = vadd.f32 %v1848, %v1891
  %v1894 = vadd.f32 %v1853, %v1891
  %v1895 = vadd.f32 %v1858, %v1891
  %v1896 = vadd.f32 %v1863, %v1891
  %v1897 = vadd.f32 %v1868, %v1891
  %v1898 = vadd.f32 %v1873, %v1891
  %v1899 = vadd.f32 %v1878, %v1891
  %v1900 = vadd.f32 %v1883, %v1891
  %1901 = vst [vmem:[%s9] sm:$0xff] %v1893
  %1902 = vst [vmem:[%s9 + $0x8] sm:$0xff] %v1894
  %1903 = vst [vmem:[%s9 + $0x10] sm:$0xff] %v1895
  %1904 = vst [vmem:[%s9 + $0x18] sm:$0xff] %v1896
  %1905 = vst [vmem:[%s9 + $0x20] sm:$0xff] %v1897
  %1906 = vst [vmem:[%s9 + $0x28] sm:$0xff] %v1898
  %1907 = vst [vmem:[%s9 + $0x30] sm:$0xff] %v1899
  %1908 = vst [vmem:[%s9 + $0x38] sm:$0xff] %v1900
  // Predicated region
  $region38: #{batch_rnn_forward.1} parent=0 // pred_check
    _
  $region39: #{batch_rnn_forward.1} parent=0 // pred_check_branch
    %1910 = sbr.rel (0) target = $region41
  $region40: #{batch_rnn_forward.1} parent=0 // pred_region
    _
  $region41: #{batch_rnn_forward.1} parent=0 // pred_fallthru
    _
  // Predicated region
  $region42: #{batch_rnn_forward.1} parent=0 // pred_check
    _
  $region43: #{batch_rnn_forward.1} parent=0 // pred_check_branch
    %1912 = sbr.rel (0) target = $region45
  $region44: #{batch_rnn_forward.1} parent=0 // pred_region
    _
  $region45: #{batch_rnn_forward.1} parent=0 // pred_fallthru
    _

</llo_original>
